<compile_context>
chip_gen: v7x
topology: tpu7x:2x2x1
jax: 0.10.0
libtpu: 0.0.40
codegen_flags: <defaults>
</compile_context>

<pallas_src>
import functools

import jax
import jax.numpy as jnp
from jax.experimental import pallas as pl
from jax.experimental.pallas import tpu as pltpu


def cross_attn_kernel(x_ref, ctx_ref, sc_ref, wq_ref, wkv_ref, o_ref,
                      *, N, H, D, eps):
    NL0, C = x_ref.shape
    NL1, Cc = ctx_ref.shape
    L0 = NL0 // N
    L1 = NL1 // N
    inner = H * D

    x = x_ref[...].astype(jnp.float32)       # (N*L0, C)   un-normed shortcut
    ctx = ctx_ref[...].astype(jnp.float32)   # (N*L1, Cc)
    sc = sc_ref[...]                         # (5, C) f32 packed scalars
    gamma, beta = sc[0:1, :], sc[1:2, :]
    bq, bk, bv = sc[2:3, :], sc[3:4, :], sc[4:5, :]   # C == inner

    # LayerNorm over channels (f32 elementwise; v5e-safe).
    mean = jnp.mean(x, axis=-1, keepdims=True)
    var = jnp.mean(jnp.square(x - mean), axis=-1, keepdims=True)
    xn = (x - mean) * jax.lax.rsqrt(var + eps) * gamma + beta

    # Flat 2D projections on the MXU: bf16 operands, f32 accumulation.
    # 1/sqrt(D) is already folded into wq/bq by the wrapper; wkv = [Wk | Wv].
    q = jnp.dot(xn.astype(jnp.bfloat16), wq_ref[...],
                preferred_element_type=jnp.float32) + bq        # (N*L0, inner)
    kv = jnp.dot(ctx.astype(jnp.bfloat16), wkv_ref[...],
                 preferred_element_type=jnp.float32)            # (N*L1, 2*inner)
    k = kv[:, :inner] + bk                                      # (N*L1, inner)
    v = kv[:, inner:] + bv                                      # (N*L1, inner)

    # Per-(batch, head) attention: static sublane/lane slices feed small 2D
    # MXU matmuls; softmax kept in f32; EUP approximate reciprocal for the
    # denominator.  The Python loops are fully unrolled (N*H = tiny).
    row_blocks = []
    for n in range(N):
        rq = slice(n * L0, (n + 1) * L0)
        rk = slice(n * L1, (n + 1) * L1)
        head_outs = []
        for h in range(H):
            cs = slice(h * D, (h + 1) * D)
            qh = q[rq, cs].astype(jnp.bfloat16)                 # (L0, D)
            kh = k[rk, cs].astype(jnp.bfloat16)                 # (L1, D)
            vh = v[rk, cs].astype(jnp.bfloat16)                 # (L1, D)
            s = jnp.einsum('qd,kd->qk', qh, kh,
                           preferred_element_type=jnp.float32)  # (L0, L1)
            s = s - jnp.max(s, axis=-1, keepdims=True)
            p = jnp.exp(s)
            p = p * pl.reciprocal(jnp.sum(p, axis=-1, keepdims=True),
                                  approx=True)
            head_outs.append(
                jnp.dot(p.astype(jnp.bfloat16), vh,
                        preferred_element_type=jnp.float32))    # (L0, D)
        row_blocks.append(jnp.concatenate(head_outs, axis=-1))  # (L0, inner)
    out = jnp.concatenate(row_blocks, axis=0)                   # (N*L0, inner)

    # proj_out == Identity (inner == C); residual with the un-normed input.
    o_ref[...] = (out + x).astype(o_ref.dtype)


def cross_attn(x, context, params, *, head_num, head_channels, eps=1e-5):
    if context is None:            # self-attention, as in the PyTorch module
        context = x
    gamma, beta, wq, bq, wk, bk, wv, bv = params
    N, L0, C = x.shape
    _, L1, Cc = context.shape
    H, D = head_num, head_channels
    inner = H * D
    assert inner == C, "proj_out is Identity only when inner_channels == in_channels"
    assert context.shape[-1] == Cc, "unexpected context channels"

    # ---- one-time wrapper-side packing (layout plumbing, zero kernel cost)
    scale = float(D) ** -0.5
    wq_s = (wq * scale).astype(jnp.bfloat16)                        # (C, inner)
    wkv = jnp.concatenate([wk, wv], axis=1).astype(jnp.bfloat16)    # (Cc, 2*inner)
    scalars = jnp.concatenate(
        [gamma.reshape(1, C).astype(jnp.float32),
         beta.reshape(1, C).astype(jnp.float32),
         (bq * scale).reshape(1, inner).astype(jnp.float32),
         bk.reshape(1, inner).astype(jnp.float32),
         bv.reshape(1, inner).astype(jnp.float32)],
        axis=0)                                                     # (5, C)

    kernel = functools.partial(cross_attn_kernel, N=N, H=H, D=D, eps=eps)
    vmem = pl.BlockSpec(memory_space=pltpu.MemorySpace.VMEM)

    # No grid: single invocation, whole working set resident in VMEM,
    # no software pipeline / double buffering for a 1-step "loop".
    out2 = pl.pallas_call(
        kernel,
        out_shape=jax.ShapeDtypeStruct((N * L0, C), x.dtype),
        in_specs=[vmem, vmem, vmem, vmem, vmem],
        out_specs=vmem,
    )(x.reshape(N * L0, C), context.reshape(N * L1, Cc), scalars, wq_s, wkv)
    return out2.reshape(N, L0, C)


def reference(x, context, params, *, head_num, head_channels, eps=1e-5):
    gamma, beta, wq, bq, wk, bk, wv, bv = params
    N, L0, C = x.shape
    mean = jnp.mean(x, axis=-1, keepdims=True)
    var = jnp.mean((x - mean) ** 2, axis=-1, keepdims=True)
    xn = (x - mean) / jnp.sqrt(var + eps) * gamma[0] + beta[0]
    q = xn @ wq + bq[0]
    k = context @ wk + bk[0]
    v = context @ wv + bv[0]
    q = q.reshape(N, L0, head_num, head_channels).transpose(0, 2, 1, 3)
    k = k.reshape(N, -1, head_num, head_channels).transpose(0, 2, 3, 1)
    v = v.reshape(N, -1, head_num, head_channels).transpose(0, 2, 1, 3)
    attn = jax.nn.softmax((q @ k) * head_channels ** (-0.5), axis=-1)
    out = (attn @ v).transpose(0, 2, 1, 3).reshape(N, L0, -1)
    return out + x


if __name__ == "__main__":
    # Small shapes consistent with the module's forward.
    N, L0, L1 = 2, 8, 8
    in_channels = 32
    context_channels = 16
    head_num, head_channels = 4, 8   # inner = 32 == in_channels -> Identity proj
    inner = head_num * head_channels

    key = jax.random.PRNGKey(0)
    kx, kc, kq, kk, kv, kbq, kbk, kbv = jax.random.split(key, 8)

    x = jax.random.normal(kx, (N, L0, in_channels), dtype=jnp.float32)
    context = jax.random.normal(kc, (N, L1, context_channels), dtype=jnp.float32)

    # Deterministic parameter init (LayerNorm: ones/zeros; Linears: small normals).
    gamma = jnp.ones((1, in_channels), jnp.float32)
    beta = jnp.zeros((1, in_channels), jnp.float32)
    wq = 0.05 * jax.random.normal(kq, (in_channels, inner), jnp.float32)
    wk = 0.05 * jax.random.normal(kk, (context_channels, inner), jnp.float32)
    wv = 0.05 * jax.random.normal(kv, (context_channels, inner), jnp.float32)
    bq = 0.01 * jax.random.normal(kbq, (1, inner), jnp.float32)
    bk = 0.01 * jax.random.normal(kbk, (1, inner), jnp.float32)
    bv = 0.01 * jax.random.normal(kbv, (1, inner), jnp.float32)
    params = (gamma, beta, wq, bq, wk, bk, wv, bv)

    out = cross_attn(x, context, params, head_num=head_num, head_channels=head_channels)
    out = jax.block_until_ready(out)

    ref = reference(x, context, params, head_num=head_num, head_channels=head_channels)
    assert out.shape == (N, L0, in_channels)
    # Tolerance accounts for bf16 MXU operands (QK^T / PV lose ~3 decimal
    # digits vs the f32 reference) and the EUP approximate reciprocal in the
    # softmax denominator; LayerNorm/softmax/residual math is exact f32.
    assert jnp.allclose(out, ref, atol=5e-3, rtol=5e-3), float(jnp.max(jnp.abs(out - ref)))

    print("KERNEL_OK")
</pallas_src>

<mosaic_0001>
module attributes {stable_mosaic.version = 11 : i64} {
  func.func @cross_attn_kernel(%arg0: memref<16x32xf32, #tpu.memory_space<vmem>>, %arg1: memref<16x16xf32, #tpu.memory_space<vmem>>, %arg2: memref<5x32xf32, #tpu.memory_space<vmem>>, %arg3: memref<32x32xbf16, #tpu.memory_space<vmem>>, %arg4: memref<16x64xbf16, #tpu.memory_space<vmem>>, %arg5: memref<16x32xf32, #tpu.memory_space<vmem>>) attributes {dimension_semantics = [], scalar_prefetch = 0 : i64, scratch_operands = 0 : i64, tpu.core_type = #tpu.core_type<tc>} {
    %c0 = arith.constant 0 : index
    %c0_0 = arith.constant 0 : index
    %0 = vector.load %arg0[%c0, %c0_0] : memref<16x32xf32, #tpu.memory_space<vmem>>, vector<16x32xf32>
    %c0_1 = arith.constant 0 : index
    %c0_2 = arith.constant 0 : index
    %1 = vector.load %arg1[%c0_1, %c0_2] : memref<16x16xf32, #tpu.memory_space<vmem>>, vector<16x16xf32>
    %c0_3 = arith.constant 0 : index
    %c0_4 = arith.constant 0 : index
    %2 = vector.load %arg2[%c0_3, %c0_4] : memref<5x32xf32, #tpu.memory_space<vmem>>, vector<5x32xf32>
    %3 = vector.extract_strided_slice %2 {offsets = [0, 0], sizes = [1, 32], strides = [1, 1]} : vector<5x32xf32> to vector<1x32xf32>
    %4 = vector.extract_strided_slice %2 {offsets = [1, 0], sizes = [1, 32], strides = [1, 1]} : vector<5x32xf32> to vector<1x32xf32>
    %5 = vector.extract_strided_slice %2 {offsets = [2, 0], sizes = [1, 32], strides = [1, 1]} : vector<5x32xf32> to vector<1x32xf32>
    %6 = vector.extract_strided_slice %2 {offsets = [3, 0], sizes = [1, 32], strides = [1, 1]} : vector<5x32xf32> to vector<1x32xf32>
    %7 = vector.extract_strided_slice %2 {offsets = [4, 0], sizes = [1, 32], strides = [1, 1]} : vector<5x32xf32> to vector<1x32xf32>
    %cst = arith.constant dense<0.000000e+00> : vector<16xf32>
    %8 = vector.multi_reduction <add>, %0, %cst [1] : vector<16x32xf32> to vector<16xf32>
    %9 = vector.shape_cast %8 : vector<16xf32> to vector<16x1xf32>
    %cst_5 = arith.constant 3.200000e+01 : f32
    %10 = vector.broadcast %cst_5 : f32 to vector<16x1xf32>
    %11 = arith.divf %9, %10 : vector<16x1xf32>
    %12 = vector.broadcast %11 : vector<16x1xf32> to vector<16x32xf32>
    %13 = arith.subf %0, %12 : vector<16x32xf32>
    %14 = arith.mulf %13, %13 : vector<16x32xf32>
    %cst_6 = arith.constant dense<0.000000e+00> : vector<16xf32>
    %15 = vector.multi_reduction <add>, %14, %cst_6 [1] : vector<16x32xf32> to vector<16xf32>
    %16 = vector.shape_cast %15 : vector<16xf32> to vector<16x1xf32>
    %cst_7 = arith.constant 3.200000e+01 : f32
    %17 = vector.broadcast %cst_7 : f32 to vector<16x1xf32>
    %18 = arith.divf %16, %17 : vector<16x1xf32>
    %19 = vector.broadcast %11 : vector<16x1xf32> to vector<16x32xf32>
    %20 = arith.subf %0, %19 : vector<16x32xf32>
    %cst_8 = arith.constant 9.99999974E-6 : f32
    %21 = vector.broadcast %cst_8 : f32 to vector<16x1xf32>
    %22 = arith.addf %18, %21 : vector<16x1xf32>
    %23 = math.rsqrt %22 : vector<16x1xf32>
    %24 = vector.broadcast %23 : vector<16x1xf32> to vector<16x32xf32>
    %25 = arith.mulf %20, %24 : vector<16x32xf32>
    %26 = vector.broadcast %3 : vector<1x32xf32> to vector<16x32xf32>
    %27 = arith.mulf %25, %26 : vector<16x32xf32>
    %28 = vector.broadcast %4 : vector<1x32xf32> to vector<16x32xf32>
    %29 = arith.addf %27, %28 : vector<16x32xf32>
    %30 = arith.truncf %29 : vector<16x32xf32> to vector<16x32xbf16>
    %c0_9 = arith.constant 0 : index
    %c0_10 = arith.constant 0 : index
    %31 = vector.load %arg3[%c0_9, %c0_10] : memref<32x32xbf16, #tpu.memory_space<vmem>>, vector<32x32xbf16>
    %cst_11 = arith.constant dense<0.000000e+00> : vector<16x32xf32>
    %32 = tpu.matmul %30, %31, %cst_11 {dimension_numbers = #tpu.dot_dimension_numbers<[1], [0], [0], [1], [0, 0, 1, 1], [], []>} : vector<16x32xbf16>, vector<32x32xbf16>, vector<16x32xf32> -> vector<16x32xf32>
    %33 = vector.broadcast %5 : vector<1x32xf32> to vector<16x32xf32>
    %34 = arith.addf %32, %33 : vector<16x32xf32>
    %35 = arith.truncf %1 : vector<16x16xf32> to vector<16x16xbf16>
    %c0_12 = arith.constant 0 : index
    %c0_13 = arith.constant 0 : index
    %36 = vector.load %arg4[%c0_12, %c0_13] : memref<16x64xbf16, #tpu.memory_space<vmem>>, vector<16x64xbf16>
    %cst_14 = arith.constant dense<0.000000e+00> : vector<16x64xf32>
    %37 = tpu.matmul %35, %36, %cst_14 {dimension_numbers = #tpu.dot_dimension_numbers<[1], [0], [0], [1], [0, 0, 1, 1], [], []>} : vector<16x16xbf16>, vector<16x64xbf16>, vector<16x64xf32> -> vector<16x64xf32>
    %38 = vector.extract_strided_slice %37 {offsets = [0, 0], sizes = [16, 32], strides = [1, 1]} : vector<16x64xf32> to vector<16x32xf32>
    %39 = vector.broadcast %6 : vector<1x32xf32> to vector<16x32xf32>
    %40 = arith.addf %38, %39 : vector<16x32xf32>
    %41 = vector.extract_strided_slice %37 {offsets = [0, 32], sizes = [16, 32], strides = [1, 1]} : vector<16x64xf32> to vector<16x32xf32>
    %42 = vector.broadcast %7 : vector<1x32xf32> to vector<16x32xf32>
    %43 = arith.addf %41, %42 : vector<16x32xf32>
    %44 = vector.extract_strided_slice %34 {offsets = [0, 0], sizes = [8, 8], strides = [1, 1]} : vector<16x32xf32> to vector<8x8xf32>
    %45 = arith.truncf %44 : vector<8x8xf32> to vector<8x8xbf16>
    %46 = vector.extract_strided_slice %40 {offsets = [0, 0], sizes = [8, 8], strides = [1, 1]} : vector<16x32xf32> to vector<8x8xf32>
    %47 = arith.truncf %46 : vector<8x8xf32> to vector<8x8xbf16>
    %48 = vector.extract_strided_slice %43 {offsets = [0, 0], sizes = [8, 8], strides = [1, 1]} : vector<16x32xf32> to vector<8x8xf32>
    %49 = arith.truncf %48 : vector<8x8xf32> to vector<8x8xbf16>
    "tpu.trace_start"() <{level = 10 : i32, message = "qd,kd->qk"}> : () -> ()
    %cst_15 = arith.constant dense<0.000000e+00> : vector<8x8xf32>
    %50 = tpu.matmul %45, %47, %cst_15 {dimension_numbers = #tpu.dot_dimension_numbers<[1], [1], [0], [0], [0, 0, 1, 0], [], []>} : vector<8x8xbf16>, vector<8x8xbf16>, vector<8x8xf32> -> vector<8x8xf32>
    "tpu.trace_stop"() : () -> ()
    %cst_16 = arith.constant dense<0xFF800000> : vector<8xf32>
    %51 = vector.multi_reduction <maximumf>, %50, %cst_16 [1] : vector<8x8xf32> to vector<8xf32>
    %52 = vector.shape_cast %51 : vector<8xf32> to vector<8x1xf32>
    %53 = vector.broadcast %52 : vector<8x1xf32> to vector<8x8xf32>
    %54 = arith.subf %50, %53 : vector<8x8xf32>
    %55 = math.exp %54 : vector<8x8xf32>
    %cst_17 = arith.constant dense<0.000000e+00> : vector<8xf32>
    %56 = vector.multi_reduction <add>, %55, %cst_17 [1] : vector<8x8xf32> to vector<8xf32>
    %57 = vector.shape_cast %56 : vector<8xf32> to vector<8x1xf32>
    %58 = tpu.reciprocal %57 {approx = true} : vector<8x1xf32> -> vector<8x1xf32>
    %59 = vector.broadcast %58 : vector<8x1xf32> to vector<8x8xf32>
    %60 = arith.mulf %55, %59 : vector<8x8xf32>
    %61 = arith.truncf %60 : vector<8x8xf32> to vector<8x8xbf16>
    %cst_18 = arith.constant dense<0.000000e+00> : vector<8x8xf32>
    %62 = tpu.matmul %61, %49, %cst_18 {dimension_numbers = #tpu.dot_dimension_numbers<[1], [0], [0], [1], [0, 0, 1, 1], [], []>} : vector<8x8xbf16>, vector<8x8xbf16>, vector<8x8xf32> -> vector<8x8xf32>
    %63 = vector.extract_strided_slice %34 {offsets = [0, 8], sizes = [8, 8], strides = [1, 1]} : vector<16x32xf32> to vector<8x8xf32>
    %64 = arith.truncf %63 : vector<8x8xf32> to vector<8x8xbf16>
    %65 = vector.extract_strided_slice %40 {offsets = [0, 8], sizes = [8, 8], strides = [1, 1]} : vector<16x32xf32> to vector<8x8xf32>
    %66 = arith.truncf %65 : vector<8x8xf32> to vector<8x8xbf16>
    %67 = vector.extract_strided_slice %43 {offsets = [0, 8], sizes = [8, 8], strides = [1, 1]} : vector<16x32xf32> to vector<8x8xf32>
    %68 = arith.truncf %67 : vector<8x8xf32> to vector<8x8xbf16>
    "tpu.trace_start"() <{level = 10 : i32, message = "qd,kd->qk"}> : () -> ()
    %cst_19 = arith.constant dense<0.000000e+00> : vector<8x8xf32>
    %69 = tpu.matmul %64, %66, %cst_19 {dimension_numbers = #tpu.dot_dimension_numbers<[1], [1], [0], [0], [0, 0, 1, 0], [], []>} : vector<8x8xbf16>, vector<8x8xbf16>, vector<8x8xf32> -> vector<8x8xf32>
    "tpu.trace_stop"() : () -> ()
    %cst_20 = arith.constant dense<0xFF800000> : vector<8xf32>
    %70 = vector.multi_reduction <maximumf>, %69, %cst_20 [1] : vector<8x8xf32> to vector<8xf32>
    %71 = vector.shape_cast %70 : vector<8xf32> to vector<8x1xf32>
    %72 = vector.broadcast %71 : vector<8x1xf32> to vector<8x8xf32>
    %73 = arith.subf %69, %72 : vector<8x8xf32>
    %74 = math.exp %73 : vector<8x8xf32>
    %cst_21 = arith.constant dense<0.000000e+00> : vector<8xf32>
    %75 = vector.multi_reduction <add>, %74, %cst_21 [1] : vector<8x8xf32> to vector<8xf32>
    %76 = vector.shape_cast %75 : vector<8xf32> to vector<8x1xf32>
    %77 = tpu.reciprocal %76 {approx = true} : vector<8x1xf32> -> vector<8x1xf32>
    %78 = vector.broadcast %77 : vector<8x1xf32> to vector<8x8xf32>
    %79 = arith.mulf %74, %78 : vector<8x8xf32>
    %80 = arith.truncf %79 : vector<8x8xf32> to vector<8x8xbf16>
    %cst_22 = arith.constant dense<0.000000e+00> : vector<8x8xf32>
    %81 = tpu.matmul %80, %68, %cst_22 {dimension_numbers = #tpu.dot_dimension_numbers<[1], [0], [0], [1], [0, 0, 1, 1], [], []>} : vector<8x8xbf16>, vector<8x8xbf16>, vector<8x8xf32> -> vector<8x8xf32>
    %82 = vector.extract_strided_slice %34 {offsets = [0, 16], sizes = [8, 8], strides = [1, 1]} : vector<16x32xf32> to vector<8x8xf32>
    %83 = arith.truncf %82 : vector<8x8xf32> to vector<8x8xbf16>
    %84 = vector.extract_strided_slice %40 {offsets = [0, 16], sizes = [8, 8], strides = [1, 1]} : vector<16x32xf32> to vector<8x8xf32>
    %85 = arith.truncf %84 : vector<8x8xf32> to vector<8x8xbf16>
    %86 = vector.extract_strided_slice %43 {offsets = [0, 16], sizes = [8, 8], strides = [1, 1]} : vector<16x32xf32> to vector<8x8xf32>
    %87 = arith.truncf %86 : vector<8x8xf32> to vector<8x8xbf16>
    "tpu.trace_start"() <{level = 10 : i32, message = "qd,kd->qk"}> : () -> ()
    %cst_23 = arith.constant dense<0.000000e+00> : vector<8x8xf32>
    %88 = tpu.matmul %83, %85, %cst_23 {dimension_numbers = #tpu.dot_dimension_numbers<[1], [1], [0], [0], [0, 0, 1, 0], [], []>} : vector<8x8xbf16>, vector<8x8xbf16>, vector<8x8xf32> -> vector<8x8xf32>
    "tpu.trace_stop"() : () -> ()
    %cst_24 = arith.constant dense<0xFF800000> : vector<8xf32>
    %89 = vector.multi_reduction <maximumf>, %88, %cst_24 [1] : vector<8x8xf32> to vector<8xf32>
    %90 = vector.shape_cast %89 : vector<8xf32> to vector<8x1xf32>
    %91 = vector.broadcast %90 : vector<8x1xf32> to vector<8x8xf32>
    %92 = arith.subf %88, %91 : vector<8x8xf32>
    %93 = math.exp %92 : vector<8x8xf32>
    %cst_25 = arith.constant dense<0.000000e+00> : vector<8xf32>
    %94 = vector.multi_reduction <add>, %93, %cst_25 [1] : vector<8x8xf32> to vector<8xf32>
    %95 = vector.shape_cast %94 : vector<8xf32> to vector<8x1xf32>
    %96 = tpu.reciprocal %95 {approx = true} : vector<8x1xf32> -> vector<8x1xf32>
    %97 = vector.broadcast %96 : vector<8x1xf32> to vector<8x8xf32>
    %98 = arith.mulf %93, %97 : vector<8x8xf32>
    %99 = arith.truncf %98 : vector<8x8xf32> to vector<8x8xbf16>
    %cst_26 = arith.constant dense<0.000000e+00> : vector<8x8xf32>
    %100 = tpu.matmul %99, %87, %cst_26 {dimension_numbers = #tpu.dot_dimension_numbers<[1], [0], [0], [1], [0, 0, 1, 1], [], []>} : vector<8x8xbf16>, vector<8x8xbf16>, vector<8x8xf32> -> vector<8x8xf32>
    %101 = vector.extract_strided_slice %34 {offsets = [0, 24], sizes = [8, 8], strides = [1, 1]} : vector<16x32xf32> to vector<8x8xf32>
    %102 = arith.truncf %101 : vector<8x8xf32> to vector<8x8xbf16>
    %103 = vector.extract_strided_slice %40 {offsets = [0, 24], sizes = [8, 8], strides = [1, 1]} : vector<16x32xf32> to vector<8x8xf32>
    %104 = arith.truncf %103 : vector<8x8xf32> to vector<8x8xbf16>
    %105 = vector.extract_strided_slice %43 {offsets = [0, 24], sizes = [8, 8], strides = [1, 1]} : vector<16x32xf32> to vector<8x8xf32>
    %106 = arith.truncf %105 : vector<8x8xf32> to vector<8x8xbf16>
    "tpu.trace_start"() <{level = 10 : i32, message = "qd,kd->qk"}> : () -> ()
    %cst_27 = arith.constant dense<0.000000e+00> : vector<8x8xf32>
    %107 = tpu.matmul %102, %104, %cst_27 {dimension_numbers = #tpu.dot_dimension_numbers<[1], [1], [0], [0], [0, 0, 1, 0], [], []>} : vector<8x8xbf16>, vector<8x8xbf16>, vector<8x8xf32> -> vector<8x8xf32>
    "tpu.trace_stop"() : () -> ()
    %cst_28 = arith.constant dense<0xFF800000> : vector<8xf32>
    %108 = vector.multi_reduction <maximumf>, %107, %cst_28 [1] : vector<8x8xf32> to vector<8xf32>
    %109 = vector.shape_cast %108 : vector<8xf32> to vector<8x1xf32>
    %110 = vector.broadcast %109 : vector<8x1xf32> to vector<8x8xf32>
    %111 = arith.subf %107, %110 : vector<8x8xf32>
    %112 = math.exp %111 : vector<8x8xf32>
    %cst_29 = arith.constant dense<0.000000e+00> : vector<8xf32>
    %113 = vector.multi_reduction <add>, %112, %cst_29 [1] : vector<8x8xf32> to vector<8xf32>
    %114 = vector.shape_cast %113 : vector<8xf32> to vector<8x1xf32>
    %115 = tpu.reciprocal %114 {approx = true} : vector<8x1xf32> -> vector<8x1xf32>
    %116 = vector.broadcast %115 : vector<8x1xf32> to vector<8x8xf32>
    %117 = arith.mulf %112, %116 : vector<8x8xf32>
    %118 = arith.truncf %117 : vector<8x8xf32> to vector<8x8xbf16>
    %cst_30 = arith.constant dense<0.000000e+00> : vector<8x8xf32>
    %119 = tpu.matmul %118, %106, %cst_30 {dimension_numbers = #tpu.dot_dimension_numbers<[1], [0], [0], [1], [0, 0, 1, 1], [], []>} : vector<8x8xbf16>, vector<8x8xbf16>, vector<8x8xf32> -> vector<8x8xf32>
    %120 = tpu.concatenate %62, %81, %100, %119 in 1 : vector<8x8xf32>, vector<8x8xf32>, vector<8x8xf32>, vector<8x8xf32> -> vector<8x32xf32>
    %121 = vector.extract_strided_slice %34 {offsets = [8, 0], sizes = [8, 8], strides = [1, 1]} : vector<16x32xf32> to vector<8x8xf32>
    %122 = arith.truncf %121 : vector<8x8xf32> to vector<8x8xbf16>
    %123 = vector.extract_strided_slice %40 {offsets = [8, 0], sizes = [8, 8], strides = [1, 1]} : vector<16x32xf32> to vector<8x8xf32>
    %124 = arith.truncf %123 : vector<8x8xf32> to vector<8x8xbf16>
    %125 = vector.extract_strided_slice %43 {offsets = [8, 0], sizes = [8, 8], strides = [1, 1]} : vector<16x32xf32> to vector<8x8xf32>
    %126 = arith.truncf %125 : vector<8x8xf32> to vector<8x8xbf16>
    "tpu.trace_start"() <{level = 10 : i32, message = "qd,kd->qk"}> : () -> ()
    %cst_31 = arith.constant dense<0.000000e+00> : vector<8x8xf32>
    %127 = tpu.matmul %122, %124, %cst_31 {dimension_numbers = #tpu.dot_dimension_numbers<[1], [1], [0], [0], [0, 0, 1, 0], [], []>} : vector<8x8xbf16>, vector<8x8xbf16>, vector<8x8xf32> -> vector<8x8xf32>
    "tpu.trace_stop"() : () -> ()
    %cst_32 = arith.constant dense<0xFF800000> : vector<8xf32>
    %128 = vector.multi_reduction <maximumf>, %127, %cst_32 [1] : vector<8x8xf32> to vector<8xf32>
    %129 = vector.shape_cast %128 : vector<8xf32> to vector<8x1xf32>
    %130 = vector.broadcast %129 : vector<8x1xf32> to vector<8x8xf32>
    %131 = arith.subf %127, %130 : vector<8x8xf32>
    %132 = math.exp %131 : vector<8x8xf32>
    %cst_33 = arith.constant dense<0.000000e+00> : vector<8xf32>
    %133 = vector.multi_reduction <add>, %132, %cst_33 [1] : vector<8x8xf32> to vector<8xf32>
    %134 = vector.shape_cast %133 : vector<8xf32> to vector<8x1xf32>
    %135 = tpu.reciprocal %134 {approx = true} : vector<8x1xf32> -> vector<8x1xf32>
    %136 = vector.broadcast %135 : vector<8x1xf32> to vector<8x8xf32>
    %137 = arith.mulf %132, %136 : vector<8x8xf32>
    %138 = arith.truncf %137 : vector<8x8xf32> to vector<8x8xbf16>
    %cst_34 = arith.constant dense<0.000000e+00> : vector<8x8xf32>
    %139 = tpu.matmul %138, %126, %cst_34 {dimension_numbers = #tpu.dot_dimension_numbers<[1], [0], [0], [1], [0, 0, 1, 1], [], []>} : vector<8x8xbf16>, vector<8x8xbf16>, vector<8x8xf32> -> vector<8x8xf32>
    %140 = vector.extract_strided_slice %34 {offsets = [8, 8], sizes = [8, 8], strides = [1, 1]} : vector<16x32xf32> to vector<8x8xf32>
    %141 = arith.truncf %140 : vector<8x8xf32> to vector<8x8xbf16>
    %142 = vector.extract_strided_slice %40 {offsets = [8, 8], sizes = [8, 8], strides = [1, 1]} : vector<16x32xf32> to vector<8x8xf32>
    %143 = arith.truncf %142 : vector<8x8xf32> to vector<8x8xbf16>
    %144 = vector.extract_strided_slice %43 {offsets = [8, 8], sizes = [8, 8], strides = [1, 1]} : vector<16x32xf32> to vector<8x8xf32>
    %145 = arith.truncf %144 : vector<8x8xf32> to vector<8x8xbf16>
    "tpu.trace_start"() <{level = 10 : i32, message = "qd,kd->qk"}> : () -> ()
    %cst_35 = arith.constant dense<0.000000e+00> : vector<8x8xf32>
    %146 = tpu.matmul %141, %143, %cst_35 {dimension_numbers = #tpu.dot_dimension_numbers<[1], [1], [0], [0], [0, 0, 1, 0], [], []>} : vector<8x8xbf16>, vector<8x8xbf16>, vector<8x8xf32> -> vector<8x8xf32>
    "tpu.trace_stop"() : () -> ()
    %cst_36 = arith.constant dense<0xFF800000> : vector<8xf32>
    %147 = vector.multi_reduction <maximumf>, %146, %cst_36 [1] : vector<8x8xf32> to vector<8xf32>
    %148 = vector.shape_cast %147 : vector<8xf32> to vector<8x1xf32>
    %149 = vector.broadcast %148 : vector<8x1xf32> to vector<8x8xf32>
    %150 = arith.subf %146, %149 : vector<8x8xf32>
    %151 = math.exp %150 : vector<8x8xf32>
    %cst_37 = arith.constant dense<0.000000e+00> : vector<8xf32>
    %152 = vector.multi_reduction <add>, %151, %cst_37 [1] : vector<8x8xf32> to vector<8xf32>
    %153 = vector.shape_cast %152 : vector<8xf32> to vector<8x1xf32>
    %154 = tpu.reciprocal %153 {approx = true} : vector<8x1xf32> -> vector<8x1xf32>
    %155 = vector.broadcast %154 : vector<8x1xf32> to vector<8x8xf32>
    %156 = arith.mulf %151, %155 : vector<8x8xf32>
    %157 = arith.truncf %156 : vector<8x8xf32> to vector<8x8xbf16>
    %cst_38 = arith.constant dense<0.000000e+00> : vector<8x8xf32>
    %158 = tpu.matmul %157, %145, %cst_38 {dimension_numbers = #tpu.dot_dimension_numbers<[1], [0], [0], [1], [0, 0, 1, 1], [], []>} : vector<8x8xbf16>, vector<8x8xbf16>, vector<8x8xf32> -> vector<8x8xf32>
    %159 = vector.extract_strided_slice %34 {offsets = [8, 16], sizes = [8, 8], strides = [1, 1]} : vector<16x32xf32> to vector<8x8xf32>
    %160 = arith.truncf %159 : vector<8x8xf32> to vector<8x8xbf16>
    %161 = vector.extract_strided_slice %40 {offsets = [8, 16], sizes = [8, 8], strides = [1, 1]} : vector<16x32xf32> to vector<8x8xf32>
    %162 = arith.truncf %161 : vector<8x8xf32> to vector<8x8xbf16>
    %163 = vector.extract_strided_slice %43 {offsets = [8, 16], sizes = [8, 8], strides = [1, 1]} : vector<16x32xf32> to vector<8x8xf32>
    %164 = arith.truncf %163 : vector<8x8xf32> to vector<8x8xbf16>
    "tpu.trace_start"() <{level = 10 : i32, message = "qd,kd->qk"}> : () -> ()
    %cst_39 = arith.constant dense<0.000000e+00> : vector<8x8xf32>
    %165 = tpu.matmul %160, %162, %cst_39 {dimension_numbers = #tpu.dot_dimension_numbers<[1], [1], [0], [0], [0, 0, 1, 0], [], []>} : vector<8x8xbf16>, vector<8x8xbf16>, vector<8x8xf32> -> vector<8x8xf32>
    "tpu.trace_stop"() : () -> ()
    %cst_40 = arith.constant dense<0xFF800000> : vector<8xf32>
    %166 = vector.multi_reduction <maximumf>, %165, %cst_40 [1] : vector<8x8xf32> to vector<8xf32>
    %167 = vector.shape_cast %166 : vector<8xf32> to vector<8x1xf32>
    %168 = vector.broadcast %167 : vector<8x1xf32> to vector<8x8xf32>
    %169 = arith.subf %165, %168 : vector<8x8xf32>
    %170 = math.exp %169 : vector<8x8xf32>
    %cst_41 = arith.constant dense<0.000000e+00> : vector<8xf32>
    %171 = vector.multi_reduction <add>, %170, %cst_41 [1] : vector<8x8xf32> to vector<8xf32>
    %172 = vector.shape_cast %171 : vector<8xf32> to vector<8x1xf32>
    %173 = tpu.reciprocal %172 {approx = true} : vector<8x1xf32> -> vector<8x1xf32>
    %174 = vector.broadcast %173 : vector<8x1xf32> to vector<8x8xf32>
    %175 = arith.mulf %170, %174 : vector<8x8xf32>
    %176 = arith.truncf %175 : vector<8x8xf32> to vector<8x8xbf16>
    %cst_42 = arith.constant dense<0.000000e+00> : vector<8x8xf32>
    %177 = tpu.matmul %176, %164, %cst_42 {dimension_numbers = #tpu.dot_dimension_numbers<[1], [0], [0], [1], [0, 0, 1, 1], [], []>} : vector<8x8xbf16>, vector<8x8xbf16>, vector<8x8xf32> -> vector<8x8xf32>
    %178 = vector.extract_strided_slice %34 {offsets = [8, 24], sizes = [8, 8], strides = [1, 1]} : vector<16x32xf32> to vector<8x8xf32>
    %179 = arith.truncf %178 : vector<8x8xf32> to vector<8x8xbf16>
    %180 = vector.extract_strided_slice %40 {offsets = [8, 24], sizes = [8, 8], strides = [1, 1]} : vector<16x32xf32> to vector<8x8xf32>
    %181 = arith.truncf %180 : vector<8x8xf32> to vector<8x8xbf16>
    %182 = vector.extract_strided_slice %43 {offsets = [8, 24], sizes = [8, 8], strides = [1, 1]} : vector<16x32xf32> to vector<8x8xf32>
    %183 = arith.truncf %182 : vector<8x8xf32> to vector<8x8xbf16>
    "tpu.trace_start"() <{level = 10 : i32, message = "qd,kd->qk"}> : () -> ()
    %cst_43 = arith.constant dense<0.000000e+00> : vector<8x8xf32>
    %184 = tpu.matmul %179, %181, %cst_43 {dimension_numbers = #tpu.dot_dimension_numbers<[1], [1], [0], [0], [0, 0, 1, 0], [], []>} : vector<8x8xbf16>, vector<8x8xbf16>, vector<8x8xf32> -> vector<8x8xf32>
    "tpu.trace_stop"() : () -> ()
    %cst_44 = arith.constant dense<0xFF800000> : vector<8xf32>
    %185 = vector.multi_reduction <maximumf>, %184, %cst_44 [1] : vector<8x8xf32> to vector<8xf32>
    %186 = vector.shape_cast %185 : vector<8xf32> to vector<8x1xf32>
    %187 = vector.broadcast %186 : vector<8x1xf32> to vector<8x8xf32>
    %188 = arith.subf %184, %187 : vector<8x8xf32>
    %189 = math.exp %188 : vector<8x8xf32>
    %cst_45 = arith.constant dense<0.000000e+00> : vector<8xf32>
    %190 = vector.multi_reduction <add>, %189, %cst_45 [1] : vector<8x8xf32> to vector<8xf32>
    %191 = vector.shape_cast %190 : vector<8xf32> to vector<8x1xf32>
    %192 = tpu.reciprocal %191 {approx = true} : vector<8x1xf32> -> vector<8x1xf32>
    %193 = vector.broadcast %192 : vector<8x1xf32> to vector<8x8xf32>
    %194 = arith.mulf %189, %193 : vector<8x8xf32>
    %195 = arith.truncf %194 : vector<8x8xf32> to vector<8x8xbf16>
    %cst_46 = arith.constant dense<0.000000e+00> : vector<8x8xf32>
    %196 = tpu.matmul %195, %183, %cst_46 {dimension_numbers = #tpu.dot_dimension_numbers<[1], [0], [0], [1], [0, 0, 1, 1], [], []>} : vector<8x8xbf16>, vector<8x8xbf16>, vector<8x8xf32> -> vector<8x8xf32>
    %197 = tpu.concatenate %139, %158, %177, %196 in 1 : vector<8x8xf32>, vector<8x8xf32>, vector<8x8xf32>, vector<8x8xf32> -> vector<8x32xf32>
    %198 = tpu.concatenate %120, %197 in 0 : vector<8x32xf32>, vector<8x32xf32> -> vector<16x32xf32>
    %199 = arith.addf %198, %0 : vector<16x32xf32>
    %c0_47 = arith.constant 0 : index
    %c0_48 = arith.constant 0 : index
    %200 = vector.load %arg5[%c0_47, %c0_48] : memref<16x32xf32, #tpu.memory_space<vmem>>, vector<16x32xf32>
    tpu.vector_store %arg5[%c0_47, %c0_48], %199 {strides = array<i32>} : memref<16x32xf32, #tpu.memory_space<vmem>>, vector<16x32xf32>,
    return
  }
}

</mosaic_0001>

<llo_original>
// kernel: tpu_custom_call.1
$region0: #{tpu_custom_call.1}
  #allocation0 [shape = 'u32[]', space=smem, size = 0x4, offset = 0x4, fixed_abs, tag = 'smem constant byte address 0x4 - core index']
  #allocation1 [shape = 'u32[144,128]{1,0:T(1,128)}', space=vmem, size = 0x12000, scoped, tag = 'internal scratch']
  %s0 = inlined_call_operand.hbm [shape: f32[16,32], index: 0, kind: input, shape index: {}]
  %s1 = inlined_call_operand.hbm [shape: f32[16,16], index: 1, kind: input, shape index: {}]
  %s2 = inlined_call_operand.hbm [shape: f32[5,32], index: 2, kind: input, shape index: {}]
  %s3 = inlined_call_operand.hbm [shape: bf16[32,32], index: 3, kind: input, shape index: {}]
  %s4 = inlined_call_operand.vmem [shape: bf16[16,64], index: 4, kind: input, shape index: {}]
  %s5 = inlined_call_operand.hbm [shape: f32[16,32], index: 5, kind: output, shape index: {}]
  %s6 = sld [smem:[#allocation0]]
  $region46: #{tpu_custom_call.1} parent=0
    _
  %s8 = ssub.s32 1, %s6
  %s9 = scalar_select 0, %s8, %s6
  $region1: #{tpu_custom_call.1} parent=0
    #allocation2 [shape = 'u8[8192]{0}', space=vmem, size = 0x2000, scoped, tag = 'input window, operand 0, single buffered']
    #allocation3 [shape = 's32[1]{0}', space=sflag, size = 0x4, scoped, tag = 'scoped memory for tpu_custom_call.1']
    #allocation4 [shape = 's32[1]{0}', space=sflag, size = 0x4, scoped, tag = 'scoped memory for tpu_custom_call.1']
    #allocation5 [shape = 'u8[8192]{0}', space=vmem, size = 0x2000, scoped, tag = 'input window, operand 1, single buffered']
    #allocation6 [shape = 's32[1]{0}', space=sflag, size = 0x4, scoped, tag = 'scoped memory for tpu_custom_call.1']
    #allocation7 [shape = 'u8[4096]{0}', space=vmem, size = 0x1000, scoped, tag = 'input window, operand 2, single buffered']
    #allocation8 [shape = 'u8[8192]{0}', space=vmem, size = 0x2000, scoped, tag = 'input window, operand 3, single buffered']
    #allocation9 [shape = 's32[1]{0}', space=sflag, size = 0x4, scoped, tag = 'scoped memory for tpu_custom_call.1']
    #allocation10 [shape = 'u8[8192]{0}', space=vmem, size = 0x2000, scoped, tag = 'output window, operand 0, single buffered']
    %10 = vsyncpa [#allocation3], 0
    %11 = vsyncpa [#allocation6], 0
    %12 = vsyncpa [#allocation9], 0
    %13 = vsyncpa [#allocation4], 0
    // Predicated region
    $region2: #{tpu_custom_call.1} parent=1 // pred_check
      _
    $region3: #{tpu_custom_call.1} parent=1 // pred_check_branch
      %15 = sbr.rel (0) target = $region5
    $region4: #{tpu_custom_call.1} parent=1 // pred_region
      %s17 = ssub.s32 256, 256
      %18 = vsyncadd [#allocation3], %s17
      %s19 = sshll.u32 [#allocation2], 4
      %s20 = int_to_ptr.vmem [resolvable:$true] %s19
      %25 = dma.hbm_to_vmem [thread:$0]  %s0, 256, %s20, [#allocation3], 128, 128, 8
    $region5: #{tpu_custom_call.1} parent=1 // pred_fallthru
      _
    // Predicated region
    $region6: #{tpu_custom_call.1} parent=1 // pred_check
      _
    $region7: #{tpu_custom_call.1} parent=1 // pred_check_branch
      %27 = sbr.rel (0) target = $region9
    $region8: #{tpu_custom_call.1} parent=1 // pred_region
      %s29 = ssub.s32 256, 256
      %30 = vsyncadd [#allocation6], %s29
      %s31 = sshll.u32 [#allocation5], 4
      %s32 = int_to_ptr.vmem [resolvable:$true] %s31
      %37 = dma.hbm_to_vmem [thread:$0]  %s1, 256, %s32, [#allocation6], 128, 128, 8
    $region9: #{tpu_custom_call.1} parent=1 // pred_fallthru
      _
    // Predicated region
    $region10: #{tpu_custom_call.1} parent=1 // pred_check
      _
    $region11: #{tpu_custom_call.1} parent=1 // pred_check_branch
      %39 = sbr.rel (0) target = $region13
    $region12: #{tpu_custom_call.1} parent=1 // pred_region
      %s41 = ssub.s32 128, 128
      %42 = vsyncadd [#allocation6], %s41
      %s44 = sshll.u32 [#allocation7], 4
      %s45 = int_to_ptr.vmem [resolvable:$true] %s44
      %47 = dma.hbm_to_vmem [thread:$0]  %s2, 128, %s45, [#allocation6]
    $region13: #{tpu_custom_call.1} parent=1 // pred_fallthru
      _
    // Predicated region
    $region14: #{tpu_custom_call.1} parent=1 // pred_check
      _
    $region15: #{tpu_custom_call.1} parent=1 // pred_check_branch
      %49 = sbr.rel (0) target = $region17
    $region16: #{tpu_custom_call.1} parent=1 // pred_region
      %s51 = ssub.s32 256, 256
      %52 = vsyncadd [#allocation9], %s51
      %s53 = sshll.u32 [#allocation8], 4
      %s54 = int_to_ptr.vmem [resolvable:$true] %s53
      %59 = dma.hbm_to_vmem [thread:$0]  %s3, 256, %s54, [#allocation9], 64, 64, 4
    $region17: #{tpu_custom_call.1} parent=1 // pred_fallthru
      _
    // Predicated region
    $region18: #{tpu_custom_call.1} parent=1 // pred_check
      _
    $region19: #{tpu_custom_call.1} parent=1 // pred_check_branch
      %61 = sbr.rel (0) target = $region21
    $region20: #{tpu_custom_call.1} parent=1 // pred_region
      _
    $region21: #{tpu_custom_call.1} parent=1 // pred_fallthru
      _
    // Predicated region
    $region22: #{tpu_custom_call.1} parent=1 // pred_check
      _
    $region23: #{tpu_custom_call.1} parent=1 // pred_check_branch
      %63 = sbr.rel (0) target = $region25
    $region24: #{tpu_custom_call.1} parent=1 // pred_region
      %64 = dma.done [#allocation3], 256
    $region25: #{tpu_custom_call.1} parent=1 // pred_fallthru
      _
    // Predicated region
    $region26: #{tpu_custom_call.1} parent=1 // pred_check
      _
    $region27: #{tpu_custom_call.1} parent=1 // pred_check_branch
      %66 = sbr.rel (0) target = $region29
    $region28: #{tpu_custom_call.1} parent=1 // pred_region
      %67 = dma.done [#allocation6], 256
    $region29: #{tpu_custom_call.1} parent=1 // pred_fallthru
      _
    // Predicated region
    $region30: #{tpu_custom_call.1} parent=1 // pred_check
      _
    $region31: #{tpu_custom_call.1} parent=1 // pred_check_branch
      %69 = sbr.rel (0) target = $region33
    $region32: #{tpu_custom_call.1} parent=1 // pred_region
      %70 = dma.done [#allocation6], 128
    $region33: #{tpu_custom_call.1} parent=1 // pred_fallthru
      _
    // Predicated region
    $region34: #{tpu_custom_call.1} parent=1 // pred_check
      _
    $region35: #{tpu_custom_call.1} parent=1 // pred_check_branch
      %72 = sbr.rel (0) target = $region37
    $region36: #{tpu_custom_call.1} parent=1 // pred_region
      %73 = dma.done [#allocation9], 256
    $region37: #{tpu_custom_call.1} parent=1 // pred_fallthru
      _
    %v75 = vld [vmem:[#allocation2] sm:$0xff]
    %v76 = vld [vmem:[#allocation2 + $0x8] sm:$0xff]
    %v77 = vld [vmem:[#allocation5] sm:$0xff]
    %v78 = vld [vmem:[#allocation5 + $0x8] sm:$0xff]
    %v79 = vld [vmem:[#allocation7] sm:$0x1f]
    %vm80 = vcmask 261120
    %v81 = vsel %vm80, %v75, 0.0
    %82 = vadd.xlane.f32.xlu0 %v81
    %v83 = vpop.xlane.xlu0 %82
    %v84 = vsel %vm80, %v76, 0.0
    %85 = vadd.xlane.f32.xlu0 %v84
    %v86 = vpop.xlane.xlu0 %85
    %v87 = vrcp.pop 32.0
    %v88 = vmul.f32 %v83, %v87
    %v89 = vmul.f32 %v86, %v87
    %v90 = vsub.f32 %v75, %v88
    %v91 = vsub.f32 %v76, %v89
    %v92 = vmul.f32 %v90, %v90
    %v93 = vmul.f32 %v91, %v91
    %v94 = vsel %vm80, %v92, 0.0
    %95 = vadd.xlane.f32.xlu0 %v94
    %v96 = vpop.xlane.xlu0 %95
    %v97 = vsel %vm80, %v93, 0.0
    %98 = vadd.xlane.f32.xlu0 %v97
    %v99 = vpop.xlane.xlu0 %98
    %v100 = vmul.f32 %v96, %v87
    %v101 = vmul.f32 %v99, %v87
    %v102 = vadd.f32 %v100, 1e-05
    %v103 = vadd.f32 %v101, 1e-05
    %v104 = vrsqrt.pop %v102
    %v105 = vrsqrt.pop %v103
    %v106 = vmul.f32 %v90, %v104
    %v107 = vmul.f32 %v91, %v105
    %v108 = vlaneseq
    %v109 = vshrl.u32 %v108, 7
    %v110 = vsub.s32 0, %v109
    %v111 = vrot.slane %v79, %v110
    %v112 = vmul.f32 %v106, %v111
    %v113 = vmul.f32 %v107, %v111
    %v114 = vlaneseq
    %v115 = vshrl.u32 %v114, 7
    %v116 = vsub.s32 1, %v115
    %v117 = vrot.slane %v79, %v116
    %v118 = vadd.f32 %v112, %v117
    %v119 = vadd.f32 %v113, %v117
    %v120 = vpack.c.bf16 %v119, %v118
    %v121 = vld [vmem:[#allocation8] sm:$0xf]
    %v122 = vld [vmem:[#allocation8 + $0x4] sm:$0xf]
    %v123 = vld [vmem:[#allocation8 + $0x8] sm:$0xf]
    %v124 = vld [vmem:[#allocation8 + $0xc] sm:$0xf]
    %v125 = vlaneseq
    %v126 = vshrl.u32 %v125, 7
    %v127 = vsub.s32 2, %v126
    %v128 = vrot.slane %v79, %v127
    %v133 = vunpack.c.l.b16 %v121
    %v134 = vunpack.c.l.b16 %v122
    %v135 = vunpack.c.l.b16 %v123
    %v136 = vunpack.c.l.b16 %v124
    %v137 = vpack.c.b16 %v134, %v133
    %v138 = vpack.c.b16 %v136, %v135
    %v142 = vsel %vm80, %v120, 0
    %144 = vmatprep.subr.bf16.mxu0 0
    %145 = vmatpush1.bf16.msra.mxu0 %v137
    %146 = vmatprep.subr.bf16.mxu0 0
    %147 = vmatpush1.bf16.msra.mxu0 %v138
    %148 = vmatprep.subr.bf16.mxu0 0
    %149 = vmatpush1.bf16.msra.mxu0 0
    %150 = vmatprep.subr.bf16.mxu0 0
    %151 = vmatpush1.bf16.msra.mxu0 0
    %152 = vmatprep.subr.bf16.mxu0 0
    %153 = vmatpush1.bf16.msra.mxu0 0
    %154 = vmatprep.subr.bf16.mxu0 0
    %155 = vmatpush1.bf16.msra.mxu0 0
    %156 = vmatprep.subr.bf16.mxu0 0
    %157 = vmatpush1.bf16.msra.mxu0 0
    %158 = vmatprep.subr.bf16.mxu0 0
    %159 = vmatpush1.bf16.msra.mxu0 0
    %160 = vmatprep.subr.bf16.mxu0 0
    %161 = vmatpush1.bf16.msra.mxu0 0
    %162 = vmatprep.subr.bf16.mxu0 0
    %163 = vmatpush1.bf16.msra.mxu0 0
    %164 = vmatprep.subr.bf16.mxu0 0
    %165 = vmatpush1.bf16.msra.mxu0 0
    %166 = vmatprep.subr.bf16.mxu0 0
    %167 = vmatpush1.bf16.msra.mxu0 0
    %168 = vmatprep.subr.bf16.mxu0 0
    %169 = vmatpush1.bf16.msra.mxu0 0
    %170 = vmatprep.subr.bf16.mxu0 0
    %171 = vmatpush1.bf16.msra.mxu0 0
    %172 = vmatprep.subr.bf16.mxu0 0
    %173 = vmatpush1.bf16.msra.mxu0 0
    %174 = vmatprep.subr.bf16.mxu0 0
    %175 = vmatpush1.bf16.msra.mxu0 0
    %176 = vmatprep.mubr.bf16.mxu0 0
    %177 = vmatmul.mubr.bf16.gmra.mrb[0].mxu0 %v142
    %v178 = vpop.f32.mrb[0].mxu0
    %v179 = vadd.f32 %v128, %v178
    %v180 = vpop.f32.mrb[0].mxu0
    %v181 = vpop.f32.mrb[0].mxu0
    %v182 = vadd.f32 %v128, %v181
    %v183 = vpop.f32.mrb[0].mxu0
    %184 = vdwg.mxu0
    %v185 = vpack.c.bf16 %v78, %v77
    %v186 = vld [vmem:[%s4] sm:$0xf]
    %v187 = vld [vmem:[%s4 + $0x4] sm:$0xf]
    %v190 = vunpack.c.l.b16 %v186
    %v191 = vunpack.c.l.b16 %v187
    %v192 = vpack.c.b16 %v191, %v190
    %vm194 = vcmask 130048
    %v196 = vsel %vm194, %v185, 0
    %198 = vmatprep.subr.bf16.mxu0 0
    %199 = vmatpush1.bf16.msra.mxu0 %v192
    %200 = vmatprep.subr.bf16.mxu0 0
    %201 = vmatpush1.bf16.msra.mxu0 0
    %202 = vmatprep.subr.bf16.mxu0 0
    %203 = vmatpush1.bf16.msra.mxu0 0
    %204 = vmatprep.subr.bf16.mxu0 0
    %205 = vmatpush1.bf16.msra.mxu0 0
    %206 = vmatprep.subr.bf16.mxu0 0
    %207 = vmatpush1.bf16.msra.mxu0 0
    %208 = vmatprep.subr.bf16.mxu0 0
    %209 = vmatpush1.bf16.msra.mxu0 0
    %210 = vmatprep.subr.bf16.mxu0 0
    %211 = vmatpush1.bf16.msra.mxu0 0
    %212 = vmatprep.subr.bf16.mxu0 0
    %213 = vmatpush1.bf16.msra.mxu0 0
    %214 = vmatprep.subr.bf16.mxu0 0
    %215 = vmatpush1.bf16.msra.mxu0 0
    %216 = vmatprep.subr.bf16.mxu0 0
    %217 = vmatpush1.bf16.msra.mxu0 0
    %218 = vmatprep.subr.bf16.mxu0 0
    %219 = vmatpush1.bf16.msra.mxu0 0
    %220 = vmatprep.subr.bf16.mxu0 0
    %221 = vmatpush1.bf16.msra.mxu0 0
    %222 = vmatprep.subr.bf16.mxu0 0
    %223 = vmatpush1.bf16.msra.mxu0 0
    %224 = vmatprep.subr.bf16.mxu0 0
    %225 = vmatpush1.bf16.msra.mxu0 0
    %226 = vmatprep.subr.bf16.mxu0 0
    %227 = vmatpush1.bf16.msra.mxu0 0
    %228 = vmatprep.subr.bf16.mxu0 0
    %229 = vmatpush1.bf16.msra.mxu0 0
    %230 = vmatprep.mubr.bf16.mxu0 0
    %231 = vmatmul.mubr.bf16.gmra.mrb[0].mxu0 %v196
    %v232 = vpop.f32.mrb[0].mxu0
    %v233 = vadd.f32 0.0, %v232
    %v234 = vpop.f32.mrb[0].mxu0
    %v235 = vpop.f32.mrb[0].mxu0
    %v236 = vadd.f32 0.0, %v235
    %v237 = vpop.f32.mrb[0].mxu0
    %238 = vdwg.mxu0
    %v239 = vlaneseq
    %v240 = vshrl.u32 %v239, 7
    %v241 = vsub.s32 3, %v240
    %v242 = vrot.slane %v79, %v241
    %v243 = vadd.f32 %v233, %v242
    %v244 = vadd.f32 %v236, %v242
    %v245 = vlaneseq
    %v246 = vshrl.u32 %v245, 7
    %v247 = vsub.s32 4, %v246
    %v248 = vrot.slane %v79, %v247
    %250 = vrot.lane.b32.xlu0 %v248, 32
    %v251 = vpop.permute.xlu0 %250
    %v253 = vadd.f32 %v233, %v251
    %v254 = vadd.f32 %v236, %v251
    %v255 = vpack.c.bf16 %v179, %v179
    %v256 = vpack.c.bf16 %v243, %v243
    %v257 = vpack.c.bf16 %v253, %v253
    %vm258 = vcmask 64512
    %v260 = vsel %vm258, %v255, 0
    %v263 = vsel %vm258, %v256, 0
    %265 = vmatprep.subr.bf16.mxu0 0
    %266 = vmatpush1.bf16.xpose.msra.mxu0 %v263
    %267 = vmatprep.subr.bf16.mxu0 0
    %268 = vmatpush1.bf16.xpose.msra.mxu0 0
    %269 = vmatprep.subr.bf16.mxu0 0
    %270 = vmatpush1.bf16.xpose.msra.mxu0 0
    %271 = vmatprep.subr.bf16.mxu0 0
    %272 = vmatpush1.bf16.xpose.msra.mxu0 0
    %273 = vmatprep.subr.bf16.mxu0 0
    %274 = vmatpush1.bf16.xpose.msra.mxu0 0
    %275 = vmatprep.subr.bf16.mxu0 0
    %276 = vmatpush1.bf16.xpose.msra.mxu0 0
    %277 = vmatprep.subr.bf16.mxu0 0
    %278 = vmatpush1.bf16.xpose.msra.mxu0 0
    %279 = vmatprep.subr.bf16.mxu0 0
    %280 = vmatpush1.bf16.xpose.msra.mxu0 0
    %281 = vmatprep.subr.bf16.mxu0 0
    %282 = vmatpush1.bf16.xpose.msra.mxu0 0
    %283 = vmatprep.subr.bf16.mxu0 0
    %284 = vmatpush1.bf16.xpose.msra.mxu0 0
    %285 = vmatprep.subr.bf16.mxu0 0
    %286 = vmatpush1.bf16.xpose.msra.mxu0 0
    %287 = vmatprep.subr.bf16.mxu0 0
    %288 = vmatpush1.bf16.xpose.msra.mxu0 0
    %289 = vmatprep.subr.bf16.mxu0 0
    %290 = vmatpush1.bf16.xpose.msra.mxu0 0
    %291 = vmatprep.subr.bf16.mxu0 0
    %292 = vmatpush1.bf16.xpose.msra.mxu0 0
    %293 = vmatprep.subr.bf16.mxu0 0
    %294 = vmatpush1.bf16.xpose.msra.mxu0 0
    %295 = vmatprep.subr.bf16.mxu0 0
    %296 = vmatpush1.bf16.xpose.msra.mxu0 0
    %297 = vmatprep.mubr.bf16.mxu0 0
    %298 = vmatmul.mubr.bf16.gmra.mrb[0].mxu0 %v260
    %v299 = vpop.f32.mrb[0].mxu0
    %v300 = vadd.f32 0.0, %v299
    %v301 = vpop.f32.mrb[0].mxu0
    %v302 = vpop.f32.mrb[0].mxu0
    %v303 = vpop.f32.mrb[0].mxu0
    %304 = vdwg.mxu0
    %v305 = vsel %vm258, %v300, -inf
    %306 = vmax.xlane.f32.xlu0 %v305
    %v307 = vpop.xlane.xlu0 %306
    %v308 = vsub.f32 %v300, %v307
    %v309 = vmul.f32 %v308, 1.442695
    %v310 = vpow.pop %v309
    %v311 = vsel %vm258, %v310, 0.0
    %312 = vadd.xlane.f32.xlu0 %v311
    %v313 = vpop.xlane.xlu0 %312
    %v314 = vrcp.pop %v313
    %v315 = vmul.f32 %v310, %v314
    %v316 = vpack.c.bf16 %v315, %v315
    %318 = vrot.lane.b32.xlu0 %v257, 96
    %v319 = vpop.permute.xlu0 %318
    %v321 = vsel %vm258, %v316, 0
    %vm323 = vcmask 1043456
    %v325 = vsel %vm323, %v319, 0
    %327 = vmatprep.subr.bf16.mxu0 0
    %328 = vmatpush1.bf16.msra.mxu0 %v325
    %329 = vmatprep.subr.bf16.mxu0 0
    %330 = vmatpush1.bf16.msra.mxu0 0
    %331 = vmatprep.subr.bf16.mxu0 0
    %332 = vmatpush1.bf16.msra.mxu0 0
    %333 = vmatprep.subr.bf16.mxu0 0
    %334 = vmatpush1.bf16.msra.mxu0 0
    %335 = vmatprep.subr.bf16.mxu0 0
    %336 = vmatpush1.bf16.msra.mxu0 0
    %337 = vmatprep.subr.bf16.mxu0 0
    %338 = vmatpush1.bf16.msra.mxu0 0
    %339 = vmatprep.subr.bf16.mxu0 0
    %340 = vmatpush1.bf16.msra.mxu0 0
    %341 = vmatprep.subr.bf16.mxu0 0
    %342 = vmatpush1.bf16.msra.mxu0 0
    %343 = vmatprep.subr.bf16.mxu0 0
    %344 = vmatpush1.bf16.msra.mxu0 0
    %345 = vmatprep.subr.bf16.mxu0 0
    %346 = vmatpush1.bf16.msra.mxu0 0
    %347 = vmatprep.subr.bf16.mxu0 0
    %348 = vmatpush1.bf16.msra.mxu0 0
    %349 = vmatprep.subr.bf16.mxu0 0
    %350 = vmatpush1.bf16.msra.mxu0 0
    %351 = vmatprep.subr.bf16.mxu0 0
    %352 = vmatpush1.bf16.msra.mxu0 0
    %353 = vmatprep.subr.bf16.mxu0 0
    %354 = vmatpush1.bf16.msra.mxu0 0
    %355 = vmatprep.subr.bf16.mxu0 0
    %356 = vmatpush1.bf16.msra.mxu0 0
    %357 = vmatprep.subr.bf16.mxu0 0
    %358 = vmatpush1.bf16.msra.mxu0 0
    %359 = vmatprep.mubr.bf16.mxu0 0
    %360 = vmatmul.mubr.bf16.gmra.mrb[0].mxu0 %v321
    %v361 = vpop.f32.mrb[0].mxu0
    %v362 = vadd.f32 0.0, %v361
    %v363 = vpop.f32.mrb[0].mxu0
    %v364 = vpop.f32.mrb[0].mxu0
    %v365 = vpop.f32.mrb[0].mxu0
    %366 = vdwg.mxu0
    %368 = vrot.lane.b32.xlu0 %v255, 120
    %v369 = vpop.permute.xlu0 %368
    %371 = vrot.lane.b32.xlu0 %v256, 120
    %v372 = vpop.permute.xlu0 %371
    %v374 = vsel %vm258, %v369, 0
    %v377 = vsel %vm258, %v372, 0
    %379 = vmatprep.subr.bf16.mxu0 0
    %380 = vmatpush1.bf16.xpose.msra.mxu0 %v377
    %381 = vmatprep.subr.bf16.mxu0 0
    %382 = vmatpush1.bf16.xpose.msra.mxu0 0
    %383 = vmatprep.subr.bf16.mxu0 0
    %384 = vmatpush1.bf16.xpose.msra.mxu0 0
    %385 = vmatprep.subr.bf16.mxu0 0
    %386 = vmatpush1.bf16.xpose.msra.mxu0 0
    %387 = vmatprep.subr.bf16.mxu0 0
    %388 = vmatpush1.bf16.xpose.msra.mxu0 0
    %389 = vmatprep.subr.bf16.mxu0 0
    %390 = vmatpush1.bf16.xpose.msra.mxu0 0
    %391 = vmatprep.subr.bf16.mxu0 0
    %392 = vmatpush1.bf16.xpose.msra.mxu0 0
    %393 = vmatprep.subr.bf16.mxu0 0
    %394 = vmatpush1.bf16.xpose.msra.mxu0 0
    %395 = vmatprep.subr.bf16.mxu0 0
    %396 = vmatpush1.bf16.xpose.msra.mxu0 0
    %397 = vmatprep.subr.bf16.mxu0 0
    %398 = vmatpush1.bf16.xpose.msra.mxu0 0
    %399 = vmatprep.subr.bf16.mxu0 0
    %400 = vmatpush1.bf16.xpose.msra.mxu0 0
    %401 = vmatprep.subr.bf16.mxu0 0
    %402 = vmatpush1.bf16.xpose.msra.mxu0 0
    %403 = vmatprep.subr.bf16.mxu0 0
    %404 = vmatpush1.bf16.xpose.msra.mxu0 0
    %405 = vmatprep.subr.bf16.mxu0 0
    %406 = vmatpush1.bf16.xpose.msra.mxu0 0
    %407 = vmatprep.subr.bf16.mxu0 0
    %408 = vmatpush1.bf16.xpose.msra.mxu0 0
    %409 = vmatprep.subr.bf16.mxu0 0
    %410 = vmatpush1.bf16.xpose.msra.mxu0 0
    %411 = vmatprep.mubr.bf16.mxu0 0
    %412 = vmatmul.mubr.bf16.gmra.mrb[0].mxu0 %v374
    %v413 = vpop.f32.mrb[0].mxu0
    %v414 = vadd.f32 0.0, %v413
    %v415 = vpop.f32.mrb[0].mxu0
    %v416 = vpop.f32.mrb[0].mxu0
    %v417 = vpop.f32.mrb[0].mxu0
    %418 = vdwg.mxu0
    %v419 = vsel %vm258, %v414, -inf
    %420 = vmax.xlane.f32.xlu0 %v419
    %v421 = vpop.xlane.xlu0 %420
    %v422 = vsub.f32 %v414, %v421
    %v423 = vmul.f32 %v422, 1.442695
    %v424 = vpow.pop %v423
    %v425 = vsel %vm258, %v424, 0.0
    %426 = vadd.xlane.f32.xlu0 %v425
    %v427 = vpop.xlane.xlu0 %426
    %v428 = vrcp.pop %v427
    %v429 = vmul.f32 %v424, %v428
    %v430 = vpack.c.bf16 %v429, %v429
    %431 = vrot.lane.b32.xlu0 %v257, 88
    %v432 = vpop.permute.xlu0 %431
    %v434 = vsel %vm258, %v430, 0
    %v437 = vsel %vm323, %v432, 0
    %439 = vmatprep.subr.bf16.mxu0 0
    %440 = vmatpush1.bf16.msra.mxu0 %v437
    %441 = vmatprep.subr.bf16.mxu0 0
    %442 = vmatpush1.bf16.msra.mxu0 0
    %443 = vmatprep.subr.bf16.mxu0 0
    %444 = vmatpush1.bf16.msra.mxu0 0
    %445 = vmatprep.subr.bf16.mxu0 0
    %446 = vmatpush1.bf16.msra.mxu0 0
    %447 = vmatprep.subr.bf16.mxu0 0
    %448 = vmatpush1.bf16.msra.mxu0 0
    %449 = vmatprep.subr.bf16.mxu0 0
    %450 = vmatpush1.bf16.msra.mxu0 0
    %451 = vmatprep.subr.bf16.mxu0 0
    %452 = vmatpush1.bf16.msra.mxu0 0
    %453 = vmatprep.subr.bf16.mxu0 0
    %454 = vmatpush1.bf16.msra.mxu0 0
    %455 = vmatprep.subr.bf16.mxu0 0
    %456 = vmatpush1.bf16.msra.mxu0 0
    %457 = vmatprep.subr.bf16.mxu0 0
    %458 = vmatpush1.bf16.msra.mxu0 0
    %459 = vmatprep.subr.bf16.mxu0 0
    %460 = vmatpush1.bf16.msra.mxu0 0
    %461 = vmatprep.subr.bf16.mxu0 0
    %462 = vmatpush1.bf16.msra.mxu0 0
    %463 = vmatprep.subr.bf16.mxu0 0
    %464 = vmatpush1.bf16.msra.mxu0 0
    %465 = vmatprep.subr.bf16.mxu0 0
    %466 = vmatpush1.bf16.msra.mxu0 0
    %467 = vmatprep.subr.bf16.mxu0 0
    %468 = vmatpush1.bf16.msra.mxu0 0
    %469 = vmatprep.subr.bf16.mxu0 0
    %470 = vmatpush1.bf16.msra.mxu0 0
    %471 = vmatprep.mubr.bf16.mxu0 0
    %472 = vmatmul.mubr.bf16.gmra.mrb[0].mxu0 %v434
    %v473 = vpop.f32.mrb[0].mxu0
    %v474 = vadd.f32 0.0, %v473
    %v475 = vpop.f32.mrb[0].mxu0
    %v476 = vpop.f32.mrb[0].mxu0
    %v477 = vpop.f32.mrb[0].mxu0
    %478 = vdwg.mxu0
    %479 = vrot.lane.b32.xlu0 %v255, 112
    %v480 = vpop.permute.xlu0 %479
    %481 = vrot.lane.b32.xlu0 %v256, 112
    %v482 = vpop.permute.xlu0 %481
    %v484 = vsel %vm258, %v480, 0
    %v487 = vsel %vm258, %v482, 0
    %489 = vmatprep.subr.bf16.mxu0 0
    %490 = vmatpush1.bf16.xpose.msra.mxu0 %v487
    %491 = vmatprep.subr.bf16.mxu0 0
    %492 = vmatpush1.bf16.xpose.msra.mxu0 0
    %493 = vmatprep.subr.bf16.mxu0 0
    %494 = vmatpush1.bf16.xpose.msra.mxu0 0
    %495 = vmatprep.subr.bf16.mxu0 0
    %496 = vmatpush1.bf16.xpose.msra.mxu0 0
    %497 = vmatprep.subr.bf16.mxu0 0
    %498 = vmatpush1.bf16.xpose.msra.mxu0 0
    %499 = vmatprep.subr.bf16.mxu0 0
    %500 = vmatpush1.bf16.xpose.msra.mxu0 0
    %501 = vmatprep.subr.bf16.mxu0 0
    %502 = vmatpush1.bf16.xpose.msra.mxu0 0
    %503 = vmatprep.subr.bf16.mxu0 0
    %504 = vmatpush1.bf16.xpose.msra.mxu0 0
    %505 = vmatprep.subr.bf16.mxu0 0
    %506 = vmatpush1.bf16.xpose.msra.mxu0 0
    %507 = vmatprep.subr.bf16.mxu0 0
    %508 = vmatpush1.bf16.xpose.msra.mxu0 0
    %509 = vmatprep.subr.bf16.mxu0 0
    %510 = vmatpush1.bf16.xpose.msra.mxu0 0
    %511 = vmatprep.subr.bf16.mxu0 0
    %512 = vmatpush1.bf16.xpose.msra.mxu0 0
    %513 = vmatprep.subr.bf16.mxu0 0
    %514 = vmatpush1.bf16.xpose.msra.mxu0 0
    %515 = vmatprep.subr.bf16.mxu0 0
    %516 = vmatpush1.bf16.xpose.msra.mxu0 0
    %517 = vmatprep.subr.bf16.mxu0 0
    %518 = vmatpush1.bf16.xpose.msra.mxu0 0
    %519 = vmatprep.subr.bf16.mxu0 0
    %520 = vmatpush1.bf16.xpose.msra.mxu0 0
    %521 = vmatprep.mubr.bf16.mxu0 0
    %522 = vmatmul.mubr.bf16.gmra.mrb[0].mxu0 %v484
    %v523 = vpop.f32.mrb[0].mxu0
    %v524 = vadd.f32 0.0, %v523
    %v525 = vpop.f32.mrb[0].mxu0
    %v526 = vpop.f32.mrb[0].mxu0
    %v527 = vpop.f32.mrb[0].mxu0
    %528 = vdwg.mxu0
    %v529 = vsel %vm258, %v524, -inf
    %530 = vmax.xlane.f32.xlu0 %v529
    %v531 = vpop.xlane.xlu0 %530
    %v532 = vsub.f32 %v524, %v531
    %v533 = vmul.f32 %v532, 1.442695
    %v534 = vpow.pop %v533
    %v535 = vsel %vm258, %v534, 0.0
    %536 = vadd.xlane.f32.xlu0 %v535
    %v537 = vpop.xlane.xlu0 %536
    %v538 = vrcp.pop %v537
    %v539 = vmul.f32 %v534, %v538
    %v540 = vpack.c.bf16 %v539, %v539
    %541 = vrot.lane.b32.xlu0 %v257, 80
    %v542 = vpop.permute.xlu0 %541
    %v544 = vsel %vm258, %v540, 0
    %v547 = vsel %vm323, %v542, 0
    %549 = vmatprep.subr.bf16.mxu0 0
    %550 = vmatpush1.bf16.msra.mxu0 %v547
    %551 = vmatprep.subr.bf16.mxu0 0
    %552 = vmatpush1.bf16.msra.mxu0 0
    %553 = vmatprep.subr.bf16.mxu0 0
    %554 = vmatpush1.bf16.msra.mxu0 0
    %555 = vmatprep.subr.bf16.mxu0 0
    %556 = vmatpush1.bf16.msra.mxu0 0
    %557 = vmatprep.subr.bf16.mxu0 0
    %558 = vmatpush1.bf16.msra.mxu0 0
    %559 = vmatprep.subr.bf16.mxu0 0
    %560 = vmatpush1.bf16.msra.mxu0 0
    %561 = vmatprep.subr.bf16.mxu0 0
    %562 = vmatpush1.bf16.msra.mxu0 0
    %563 = vmatprep.subr.bf16.mxu0 0
    %564 = vmatpush1.bf16.msra.mxu0 0
    %565 = vmatprep.subr.bf16.mxu0 0
    %566 = vmatpush1.bf16.msra.mxu0 0
    %567 = vmatprep.subr.bf16.mxu0 0
    %568 = vmatpush1.bf16.msra.mxu0 0
    %569 = vmatprep.subr.bf16.mxu0 0
    %570 = vmatpush1.bf16.msra.mxu0 0
    %571 = vmatprep.subr.bf16.mxu0 0
    %572 = vmatpush1.bf16.msra.mxu0 0
    %573 = vmatprep.subr.bf16.mxu0 0
    %574 = vmatpush1.bf16.msra.mxu0 0
    %575 = vmatprep.subr.bf16.mxu0 0
    %576 = vmatpush1.bf16.msra.mxu0 0
    %577 = vmatprep.subr.bf16.mxu0 0
    %578 = vmatpush1.bf16.msra.mxu0 0
    %579 = vmatprep.subr.bf16.mxu0 0
    %580 = vmatpush1.bf16.msra.mxu0 0
    %581 = vmatprep.mubr.bf16.mxu0 0
    %582 = vmatmul.mubr.bf16.gmra.mrb[0].mxu0 %v544
    %v583 = vpop.f32.mrb[0].mxu0
    %v584 = vadd.f32 0.0, %v583
    %v585 = vpop.f32.mrb[0].mxu0
    %v586 = vpop.f32.mrb[0].mxu0
    %v587 = vpop.f32.mrb[0].mxu0
    %588 = vdwg.mxu0
    %589 = vrot.lane.b32.xlu0 %v255, 104
    %v590 = vpop.permute.xlu0 %589
    %591 = vrot.lane.b32.xlu0 %v256, 104
    %v592 = vpop.permute.xlu0 %591
    %v594 = vsel %vm258, %v590, 0
    %v597 = vsel %vm258, %v592, 0
    %599 = vmatprep.subr.bf16.mxu0 0
    %600 = vmatpush1.bf16.xpose.msra.mxu0 %v597
    %601 = vmatprep.subr.bf16.mxu0 0
    %602 = vmatpush1.bf16.xpose.msra.mxu0 0
    %603 = vmatprep.subr.bf16.mxu0 0
    %604 = vmatpush1.bf16.xpose.msra.mxu0 0
    %605 = vmatprep.subr.bf16.mxu0 0
    %606 = vmatpush1.bf16.xpose.msra.mxu0 0
    %607 = vmatprep.subr.bf16.mxu0 0
    %608 = vmatpush1.bf16.xpose.msra.mxu0 0
    %609 = vmatprep.subr.bf16.mxu0 0
    %610 = vmatpush1.bf16.xpose.msra.mxu0 0
    %611 = vmatprep.subr.bf16.mxu0 0
    %612 = vmatpush1.bf16.xpose.msra.mxu0 0
    %613 = vmatprep.subr.bf16.mxu0 0
    %614 = vmatpush1.bf16.xpose.msra.mxu0 0
    %615 = vmatprep.subr.bf16.mxu0 0
    %616 = vmatpush1.bf16.xpose.msra.mxu0 0
    %617 = vmatprep.subr.bf16.mxu0 0
    %618 = vmatpush1.bf16.xpose.msra.mxu0 0
    %619 = vmatprep.subr.bf16.mxu0 0
    %620 = vmatpush1.bf16.xpose.msra.mxu0 0
    %621 = vmatprep.subr.bf16.mxu0 0
    %622 = vmatpush1.bf16.xpose.msra.mxu0 0
    %623 = vmatprep.subr.bf16.mxu0 0
    %624 = vmatpush1.bf16.xpose.msra.mxu0 0
    %625 = vmatprep.subr.bf16.mxu0 0
    %626 = vmatpush1.bf16.xpose.msra.mxu0 0
    %627 = vmatprep.subr.bf16.mxu0 0
    %628 = vmatpush1.bf16.xpose.msra.mxu0 0
    %629 = vmatprep.subr.bf16.mxu0 0
    %630 = vmatpush1.bf16.xpose.msra.mxu0 0
    %631 = vmatprep.mubr.bf16.mxu0 0
    %632 = vmatmul.mubr.bf16.gmra.mrb[0].mxu0 %v594
    %v633 = vpop.f32.mrb[0].mxu0
    %v634 = vadd.f32 0.0, %v633
    %v635 = vpop.f32.mrb[0].mxu0
    %v636 = vpop.f32.mrb[0].mxu0
    %v637 = vpop.f32.mrb[0].mxu0
    %638 = vdwg.mxu0
    %v639 = vsel %vm258, %v634, -inf
    %640 = vmax.xlane.f32.xlu0 %v639
    %v641 = vpop.xlane.xlu0 %640
    %v642 = vsub.f32 %v634, %v641
    %v643 = vmul.f32 %v642, 1.442695
    %v644 = vpow.pop %v643
    %v645 = vsel %vm258, %v644, 0.0
    %646 = vadd.xlane.f32.xlu0 %v645
    %v647 = vpop.xlane.xlu0 %646
    %v648 = vrcp.pop %v647
    %v649 = vmul.f32 %v644, %v648
    %v650 = vpack.c.bf16 %v649, %v649
    %651 = vrot.lane.b32.xlu0 %v257, 72
    %v652 = vpop.permute.xlu0 %651
    %v654 = vsel %vm258, %v650, 0
    %v657 = vsel %vm323, %v652, 0
    %659 = vmatprep.subr.bf16.mxu0 0
    %660 = vmatpush1.bf16.msra.mxu0 %v657
    %661 = vmatprep.subr.bf16.mxu0 0
    %662 = vmatpush1.bf16.msra.mxu0 0
    %663 = vmatprep.subr.bf16.mxu0 0
    %664 = vmatpush1.bf16.msra.mxu0 0
    %665 = vmatprep.subr.bf16.mxu0 0
    %666 = vmatpush1.bf16.msra.mxu0 0
    %667 = vmatprep.subr.bf16.mxu0 0
    %668 = vmatpush1.bf16.msra.mxu0 0
    %669 = vmatprep.subr.bf16.mxu0 0
    %670 = vmatpush1.bf16.msra.mxu0 0
    %671 = vmatprep.subr.bf16.mxu0 0
    %672 = vmatpush1.bf16.msra.mxu0 0
    %673 = vmatprep.subr.bf16.mxu0 0
    %674 = vmatpush1.bf16.msra.mxu0 0
    %675 = vmatprep.subr.bf16.mxu0 0
    %676 = vmatpush1.bf16.msra.mxu0 0
    %677 = vmatprep.subr.bf16.mxu0 0
    %678 = vmatpush1.bf16.msra.mxu0 0
    %679 = vmatprep.subr.bf16.mxu0 0
    %680 = vmatpush1.bf16.msra.mxu0 0
    %681 = vmatprep.subr.bf16.mxu0 0
    %682 = vmatpush1.bf16.msra.mxu0 0
    %683 = vmatprep.subr.bf16.mxu0 0
    %684 = vmatpush1.bf16.msra.mxu0 0
    %685 = vmatprep.subr.bf16.mxu0 0
    %686 = vmatpush1.bf16.msra.mxu0 0
    %687 = vmatprep.subr.bf16.mxu0 0
    %688 = vmatpush1.bf16.msra.mxu0 0
    %689 = vmatprep.subr.bf16.mxu0 0
    %690 = vmatpush1.bf16.msra.mxu0 0
    %691 = vmatprep.mubr.bf16.mxu0 0
    %692 = vmatmul.mubr.bf16.gmra.mrb[0].mxu0 %v654
    %v693 = vpop.f32.mrb[0].mxu0
    %v694 = vadd.f32 0.0, %v693
    %v695 = vpop.f32.mrb[0].mxu0
    %v696 = vpop.f32.mrb[0].mxu0
    %v697 = vpop.f32.mrb[0].mxu0
    %698 = vdwg.mxu0
    %700 = vrot.lane.b32.xlu0 %v474, 8
    %v701 = vpop.permute.xlu0 %700
    %704 = vrot.lane.b32.xlu0 %v584, 16
    %v705 = vpop.permute.xlu0 %704
    %708 = vrot.lane.b32.xlu0 %v694, 24
    %v709 = vpop.permute.xlu0 %708
    %v711 = vsel %vm258, %v362, %v701
    %v712 = vsel %vm194, %v711, %v705
    %vm713 = vcmask 195584
    %v714 = vsel %vm713, %v712, %v709
    %v715 = vpack.c.bf16 %v182, %v182
    %v716 = vpack.c.bf16 %v244, %v244
    %v717 = vpack.c.bf16 %v254, %v254
    %v719 = vsel %vm258, %v715, 0
    %v722 = vsel %vm258, %v716, 0
    %724 = vmatprep.subr.bf16.mxu0 0
    %725 = vmatpush1.bf16.xpose.msra.mxu0 %v722
    %726 = vmatprep.subr.bf16.mxu0 0
    %727 = vmatpush1.bf16.xpose.msra.mxu0 0
    %728 = vmatprep.subr.bf16.mxu0 0
    %729 = vmatpush1.bf16.xpose.msra.mxu0 0
    %730 = vmatprep.subr.bf16.mxu0 0
    %731 = vmatpush1.bf16.xpose.msra.mxu0 0
    %732 = vmatprep.subr.bf16.mxu0 0
    %733 = vmatpush1.bf16.xpose.msra.mxu0 0
    %734 = vmatprep.subr.bf16.mxu0 0
    %735 = vmatpush1.bf16.xpose.msra.mxu0 0
    %736 = vmatprep.subr.bf16.mxu0 0
    %737 = vmatpush1.bf16.xpose.msra.mxu0 0
    %738 = vmatprep.subr.bf16.mxu0 0
    %739 = vmatpush1.bf16.xpose.msra.mxu0 0
    %740 = vmatprep.subr.bf16.mxu0 0
    %741 = vmatpush1.bf16.xpose.msra.mxu0 0
    %742 = vmatprep.subr.bf16.mxu0 0
    %743 = vmatpush1.bf16.xpose.msra.mxu0 0
    %744 = vmatprep.subr.bf16.mxu0 0
    %745 = vmatpush1.bf16.xpose.msra.mxu0 0
    %746 = vmatprep.subr.bf16.mxu0 0
    %747 = vmatpush1.bf16.xpose.msra.mxu0 0
    %748 = vmatprep.subr.bf16.mxu0 0
    %749 = vmatpush1.bf16.xpose.msra.mxu0 0
    %750 = vmatprep.subr.bf16.mxu0 0
    %751 = vmatpush1.bf16.xpose.msra.mxu0 0
    %752 = vmatprep.subr.bf16.mxu0 0
    %753 = vmatpush1.bf16.xpose.msra.mxu0 0
    %754 = vmatprep.subr.bf16.mxu0 0
    %755 = vmatpush1.bf16.xpose.msra.mxu0 0
    %756 = vmatprep.mubr.bf16.mxu0 0
    %757 = vmatmul.mubr.bf16.gmra.mrb[0].mxu0 %v719
    %v758 = vpop.f32.mrb[0].mxu0
    %v759 = vadd.f32 0.0, %v758
    %v760 = vpop.f32.mrb[0].mxu0
    %v761 = vpop.f32.mrb[0].mxu0
    %v762 = vpop.f32.mrb[0].mxu0
    %763 = vdwg.mxu0
    %v764 = vsel %vm258, %v759, -inf
    %765 = vmax.xlane.f32.xlu0 %v764
    %v766 = vpop.xlane.xlu0 %765
    %v767 = vsub.f32 %v759, %v766
    %v768 = vmul.f32 %v767, 1.442695
    %v769 = vpow.pop %v768
    %v770 = vsel %vm258, %v769, 0.0
    %771 = vadd.xlane.f32.xlu0 %v770
    %v772 = vpop.xlane.xlu0 %771
    %v773 = vrcp.pop %v772
    %v774 = vmul.f32 %v769, %v773
    %v775 = vpack.c.bf16 %v774, %v774
    %777 = vrot.lane.b32.xlu0 %v717, 96
    %v778 = vpop.permute.xlu0 %777
    %v780 = vsel %vm258, %v775, 0
    %v783 = vsel %vm323, %v778, 0
    %785 = vmatprep.subr.bf16.mxu0 0
    %786 = vmatpush1.bf16.msra.mxu0 %v783
    %787 = vmatprep.subr.bf16.mxu0 0
    %788 = vmatpush1.bf16.msra.mxu0 0
    %789 = vmatprep.subr.bf16.mxu0 0
    %790 = vmatpush1.bf16.msra.mxu0 0
    %791 = vmatprep.subr.bf16.mxu0 0
    %792 = vmatpush1.bf16.msra.mxu0 0
    %793 = vmatprep.subr.bf16.mxu0 0
    %794 = vmatpush1.bf16.msra.mxu0 0
    %795 = vmatprep.subr.bf16.mxu0 0
    %796 = vmatpush1.bf16.msra.mxu0 0
    %797 = vmatprep.subr.bf16.mxu0 0
    %798 = vmatpush1.bf16.msra.mxu0 0
    %799 = vmatprep.subr.bf16.mxu0 0
    %800 = vmatpush1.bf16.msra.mxu0 0
    %801 = vmatprep.subr.bf16.mxu0 0
    %802 = vmatpush1.bf16.msra.mxu0 0
    %803 = vmatprep.subr.bf16.mxu0 0
    %804 = vmatpush1.bf16.msra.mxu0 0
    %805 = vmatprep.subr.bf16.mxu0 0
    %806 = vmatpush1.bf16.msra.mxu0 0
    %807 = vmatprep.subr.bf16.mxu0 0
    %808 = vmatpush1.bf16.msra.mxu0 0
    %809 = vmatprep.subr.bf16.mxu0 0
    %810 = vmatpush1.bf16.msra.mxu0 0
    %811 = vmatprep.subr.bf16.mxu0 0
    %812 = vmatpush1.bf16.msra.mxu0 0
    %813 = vmatprep.subr.bf16.mxu0 0
    %814 = vmatpush1.bf16.msra.mxu0 0
    %815 = vmatprep.subr.bf16.mxu0 0
    %816 = vmatpush1.bf16.msra.mxu0 0
    %817 = vmatprep.mubr.bf16.mxu0 0
    %818 = vmatmul.mubr.bf16.gmra.mrb[0].mxu0 %v780
    %v819 = vpop.f32.mrb[0].mxu0
    %v820 = vadd.f32 0.0, %v819
    %v821 = vpop.f32.mrb[0].mxu0
    %v822 = vpop.f32.mrb[0].mxu0
    %v823 = vpop.f32.mrb[0].mxu0
    %824 = vdwg.mxu0
    %826 = vrot.lane.b32.xlu0 %v715, 120
    %v827 = vpop.permute.xlu0 %826
    %829 = vrot.lane.b32.xlu0 %v716, 120
    %v830 = vpop.permute.xlu0 %829
    %v832 = vsel %vm258, %v827, 0
    %v835 = vsel %vm258, %v830, 0
    %837 = vmatprep.subr.bf16.mxu0 0
    %838 = vmatpush1.bf16.xpose.msra.mxu0 %v835
    %839 = vmatprep.subr.bf16.mxu0 0
    %840 = vmatpush1.bf16.xpose.msra.mxu0 0
    %841 = vmatprep.subr.bf16.mxu0 0
    %842 = vmatpush1.bf16.xpose.msra.mxu0 0
    %843 = vmatprep.subr.bf16.mxu0 0
    %844 = vmatpush1.bf16.xpose.msra.mxu0 0
    %845 = vmatprep.subr.bf16.mxu0 0
    %846 = vmatpush1.bf16.xpose.msra.mxu0 0
    %847 = vmatprep.subr.bf16.mxu0 0
    %848 = vmatpush1.bf16.xpose.msra.mxu0 0
    %849 = vmatprep.subr.bf16.mxu0 0
    %850 = vmatpush1.bf16.xpose.msra.mxu0 0
    %851 = vmatprep.subr.bf16.mxu0 0
    %852 = vmatpush1.bf16.xpose.msra.mxu0 0
    %853 = vmatprep.subr.bf16.mxu0 0
    %854 = vmatpush1.bf16.xpose.msra.mxu0 0
    %855 = vmatprep.subr.bf16.mxu0 0
    %856 = vmatpush1.bf16.xpose.msra.mxu0 0
    %857 = vmatprep.subr.bf16.mxu0 0
    %858 = vmatpush1.bf16.xpose.msra.mxu0 0
    %859 = vmatprep.subr.bf16.mxu0 0
    %860 = vmatpush1.bf16.xpose.msra.mxu0 0
    %861 = vmatprep.subr.bf16.mxu0 0
    %862 = vmatpush1.bf16.xpose.msra.mxu0 0
    %863 = vmatprep.subr.bf16.mxu0 0
    %864 = vmatpush1.bf16.xpose.msra.mxu0 0
    %865 = vmatprep.subr.bf16.mxu0 0
    %866 = vmatpush1.bf16.xpose.msra.mxu0 0
    %867 = vmatprep.subr.bf16.mxu0 0
    %868 = vmatpush1.bf16.xpose.msra.mxu0 0
    %869 = vmatprep.mubr.bf16.mxu0 0
    %870 = vmatmul.mubr.bf16.gmra.mrb[0].mxu0 %v832
    %v871 = vpop.f32.mrb[0].mxu0
    %v872 = vadd.f32 0.0, %v871
    %v873 = vpop.f32.mrb[0].mxu0
    %v874 = vpop.f32.mrb[0].mxu0
    %v875 = vpop.f32.mrb[0].mxu0
    %876 = vdwg.mxu0
    %v877 = vsel %vm258, %v872, -inf
    %878 = vmax.xlane.f32.xlu0 %v877
    %v879 = vpop.xlane.xlu0 %878
    %v880 = vsub.f32 %v872, %v879
    %v881 = vmul.f32 %v880, 1.442695
    %v882 = vpow.pop %v881
    %v883 = vsel %vm258, %v882, 0.0
    %884 = vadd.xlane.f32.xlu0 %v883
    %v885 = vpop.xlane.xlu0 %884
    %v886 = vrcp.pop %v885
    %v887 = vmul.f32 %v882, %v886
    %v888 = vpack.c.bf16 %v887, %v887
    %889 = vrot.lane.b32.xlu0 %v717, 88
    %v890 = vpop.permute.xlu0 %889
    %v892 = vsel %vm258, %v888, 0
    %v895 = vsel %vm323, %v890, 0
    %897 = vmatprep.subr.bf16.mxu0 0
    %898 = vmatpush1.bf16.msra.mxu0 %v895
    %899 = vmatprep.subr.bf16.mxu0 0
    %900 = vmatpush1.bf16.msra.mxu0 0
    %901 = vmatprep.subr.bf16.mxu0 0
    %902 = vmatpush1.bf16.msra.mxu0 0
    %903 = vmatprep.subr.bf16.mxu0 0
    %904 = vmatpush1.bf16.msra.mxu0 0
    %905 = vmatprep.subr.bf16.mxu0 0
    %906 = vmatpush1.bf16.msra.mxu0 0
    %907 = vmatprep.subr.bf16.mxu0 0
    %908 = vmatpush1.bf16.msra.mxu0 0
    %909 = vmatprep.subr.bf16.mxu0 0
    %910 = vmatpush1.bf16.msra.mxu0 0
    %911 = vmatprep.subr.bf16.mxu0 0
    %912 = vmatpush1.bf16.msra.mxu0 0
    %913 = vmatprep.subr.bf16.mxu0 0
    %914 = vmatpush1.bf16.msra.mxu0 0
    %915 = vmatprep.subr.bf16.mxu0 0
    %916 = vmatpush1.bf16.msra.mxu0 0
    %917 = vmatprep.subr.bf16.mxu0 0
    %918 = vmatpush1.bf16.msra.mxu0 0
    %919 = vmatprep.subr.bf16.mxu0 0
    %920 = vmatpush1.bf16.msra.mxu0 0
    %921 = vmatprep.subr.bf16.mxu0 0
    %922 = vmatpush1.bf16.msra.mxu0 0
    %923 = vmatprep.subr.bf16.mxu0 0
    %924 = vmatpush1.bf16.msra.mxu0 0
    %925 = vmatprep.subr.bf16.mxu0 0
    %926 = vmatpush1.bf16.msra.mxu0 0
    %927 = vmatprep.subr.bf16.mxu0 0
    %928 = vmatpush1.bf16.msra.mxu0 0
    %929 = vmatprep.mubr.bf16.mxu0 0
    %930 = vmatmul.mubr.bf16.gmra.mrb[0].mxu0 %v892
    %v931 = vpop.f32.mrb[0].mxu0
    %v932 = vadd.f32 0.0, %v931
    %v933 = vpop.f32.mrb[0].mxu0
    %v934 = vpop.f32.mrb[0].mxu0
    %v935 = vpop.f32.mrb[0].mxu0
    %936 = vdwg.mxu0
    %937 = vrot.lane.b32.xlu0 %v715, 112
    %v938 = vpop.permute.xlu0 %937
    %939 = vrot.lane.b32.xlu0 %v716, 112
    %v940 = vpop.permute.xlu0 %939
    %v942 = vsel %vm258, %v938, 0
    %v945 = vsel %vm258, %v940, 0
    %947 = vmatprep.subr.bf16.mxu0 0
    %948 = vmatpush1.bf16.xpose.msra.mxu0 %v945
    %949 = vmatprep.subr.bf16.mxu0 0
    %950 = vmatpush1.bf16.xpose.msra.mxu0 0
    %951 = vmatprep.subr.bf16.mxu0 0
    %952 = vmatpush1.bf16.xpose.msra.mxu0 0
    %953 = vmatprep.subr.bf16.mxu0 0
    %954 = vmatpush1.bf16.xpose.msra.mxu0 0
    %955 = vmatprep.subr.bf16.mxu0 0
    %956 = vmatpush1.bf16.xpose.msra.mxu0 0
    %957 = vmatprep.subr.bf16.mxu0 0
    %958 = vmatpush1.bf16.xpose.msra.mxu0 0
    %959 = vmatprep.subr.bf16.mxu0 0
    %960 = vmatpush1.bf16.xpose.msra.mxu0 0
    %961 = vmatprep.subr.bf16.mxu0 0
    %962 = vmatpush1.bf16.xpose.msra.mxu0 0
    %963 = vmatprep.subr.bf16.mxu0 0
    %964 = vmatpush1.bf16.xpose.msra.mxu0 0
    %965 = vmatprep.subr.bf16.mxu0 0
    %966 = vmatpush1.bf16.xpose.msra.mxu0 0
    %967 = vmatprep.subr.bf16.mxu0 0
    %968 = vmatpush1.bf16.xpose.msra.mxu0 0
    %969 = vmatprep.subr.bf16.mxu0 0
    %970 = vmatpush1.bf16.xpose.msra.mxu0 0
    %971 = vmatprep.subr.bf16.mxu0 0
    %972 = vmatpush1.bf16.xpose.msra.mxu0 0
    %973 = vmatprep.subr.bf16.mxu0 0
    %974 = vmatpush1.bf16.xpose.msra.mxu0 0
    %975 = vmatprep.subr.bf16.mxu0 0
    %976 = vmatpush1.bf16.xpose.msra.mxu0 0
    %977 = vmatprep.subr.bf16.mxu0 0
    %978 = vmatpush1.bf16.xpose.msra.mxu0 0
    %979 = vmatprep.mubr.bf16.mxu0 0
    %980 = vmatmul.mubr.bf16.gmra.mrb[0].mxu0 %v942
    %v981 = vpop.f32.mrb[0].mxu0
    %v982 = vadd.f32 0.0, %v981
    %v983 = vpop.f32.mrb[0].mxu0
    %v984 = vpop.f32.mrb[0].mxu0
    %v985 = vpop.f32.mrb[0].mxu0
    %986 = vdwg.mxu0
    %v987 = vsel %vm258, %v982, -inf
    %988 = vmax.xlane.f32.xlu0 %v987
    %v989 = vpop.xlane.xlu0 %988
    %v990 = vsub.f32 %v982, %v989
    %v991 = vmul.f32 %v990, 1.442695
    %v992 = vpow.pop %v991
    %v993 = vsel %vm258, %v992, 0.0
    %994 = vadd.xlane.f32.xlu0 %v993
    %v995 = vpop.xlane.xlu0 %994
    %v996 = vrcp.pop %v995
    %v997 = vmul.f32 %v992, %v996
    %v998 = vpack.c.bf16 %v997, %v997
    %999 = vrot.lane.b32.xlu0 %v717, 80
    %v1000 = vpop.permute.xlu0 %999
    %v1002 = vsel %vm258, %v998, 0
    %v1005 = vsel %vm323, %v1000, 0
    %1007 = vmatprep.subr.bf16.mxu0 0
    %1008 = vmatpush1.bf16.msra.mxu0 %v1005
    %1009 = vmatprep.subr.bf16.mxu0 0
    %1010 = vmatpush1.bf16.msra.mxu0 0
    %1011 = vmatprep.subr.bf16.mxu0 0
    %1012 = vmatpush1.bf16.msra.mxu0 0
    %1013 = vmatprep.subr.bf16.mxu0 0
    %1014 = vmatpush1.bf16.msra.mxu0 0
    %1015 = vmatprep.subr.bf16.mxu0 0
    %1016 = vmatpush1.bf16.msra.mxu0 0
    %1017 = vmatprep.subr.bf16.mxu0 0
    %1018 = vmatpush1.bf16.msra.mxu0 0
    %1019 = vmatprep.subr.bf16.mxu0 0
    %1020 = vmatpush1.bf16.msra.mxu0 0
    %1021 = vmatprep.subr.bf16.mxu0 0
    %1022 = vmatpush1.bf16.msra.mxu0 0
    %1023 = vmatprep.subr.bf16.mxu0 0
    %1024 = vmatpush1.bf16.msra.mxu0 0
    %1025 = vmatprep.subr.bf16.mxu0 0
    %1026 = vmatpush1.bf16.msra.mxu0 0
    %1027 = vmatprep.subr.bf16.mxu0 0
    %1028 = vmatpush1.bf16.msra.mxu0 0
    %1029 = vmatprep.subr.bf16.mxu0 0
    %1030 = vmatpush1.bf16.msra.mxu0 0
    %1031 = vmatprep.subr.bf16.mxu0 0
    %1032 = vmatpush1.bf16.msra.mxu0 0
    %1033 = vmatprep.subr.bf16.mxu0 0
    %1034 = vmatpush1.bf16.msra.mxu0 0
    %1035 = vmatprep.subr.bf16.mxu0 0
    %1036 = vmatpush1.bf16.msra.mxu0 0
    %1037 = vmatprep.subr.bf16.mxu0 0
    %1038 = vmatpush1.bf16.msra.mxu0 0
    %1039 = vmatprep.mubr.bf16.mxu0 0
    %1040 = vmatmul.mubr.bf16.gmra.mrb[0].mxu0 %v1002
    %v1041 = vpop.f32.mrb[0].mxu0
    %v1042 = vadd.f32 0.0, %v1041
    %v1043 = vpop.f32.mrb[0].mxu0
    %v1044 = vpop.f32.mrb[0].mxu0
    %v1045 = vpop.f32.mrb[0].mxu0
    %1046 = vdwg.mxu0
    %1047 = vrot.lane.b32.xlu0 %v715, 104
    %v1048 = vpop.permute.xlu0 %1047
    %1049 = vrot.lane.b32.xlu0 %v716, 104
    %v1050 = vpop.permute.xlu0 %1049
    %v1052 = vsel %vm258, %v1048, 0
    %v1055 = vsel %vm258, %v1050, 0
    %1057 = vmatprep.subr.bf16.mxu0 0
    %1058 = vmatpush1.bf16.xpose.msra.mxu0 %v1055
    %1059 = vmatprep.subr.bf16.mxu0 0
    %1060 = vmatpush1.bf16.xpose.msra.mxu0 0
    %1061 = vmatprep.subr.bf16.mxu0 0
    %1062 = vmatpush1.bf16.xpose.msra.mxu0 0
    %1063 = vmatprep.subr.bf16.mxu0 0
    %1064 = vmatpush1.bf16.xpose.msra.mxu0 0
    %1065 = vmatprep.subr.bf16.mxu0 0
    %1066 = vmatpush1.bf16.xpose.msra.mxu0 0
    %1067 = vmatprep.subr.bf16.mxu0 0
    %1068 = vmatpush1.bf16.xpose.msra.mxu0 0
    %1069 = vmatprep.subr.bf16.mxu0 0
    %1070 = vmatpush1.bf16.xpose.msra.mxu0 0
    %1071 = vmatprep.subr.bf16.mxu0 0
    %1072 = vmatpush1.bf16.xpose.msra.mxu0 0
    %1073 = vmatprep.subr.bf16.mxu0 0
    %1074 = vmatpush1.bf16.xpose.msra.mxu0 0
    %1075 = vmatprep.subr.bf16.mxu0 0
    %1076 = vmatpush1.bf16.xpose.msra.mxu0 0
    %1077 = vmatprep.subr.bf16.mxu0 0
    %1078 = vmatpush1.bf16.xpose.msra.mxu0 0
    %1079 = vmatprep.subr.bf16.mxu0 0
    %1080 = vmatpush1.bf16.xpose.msra.mxu0 0
    %1081 = vmatprep.subr.bf16.mxu0 0
    %1082 = vmatpush1.bf16.xpose.msra.mxu0 0
    %1083 = vmatprep.subr.bf16.mxu0 0
    %1084 = vmatpush1.bf16.xpose.msra.mxu0 0
    %1085 = vmatprep.subr.bf16.mxu0 0
    %1086 = vmatpush1.bf16.xpose.msra.mxu0 0
    %1087 = vmatprep.subr.bf16.mxu0 0
    %1088 = vmatpush1.bf16.xpose.msra.mxu0 0
    %1089 = vmatprep.mubr.bf16.mxu0 0
    %1090 = vmatmul.mubr.bf16.gmra.mrb[0].mxu0 %v1052
    %v1091 = vpop.f32.mrb[0].mxu0
    %v1092 = vadd.f32 0.0, %v1091
    %v1093 = vpop.f32.mrb[0].mxu0
    %v1094 = vpop.f32.mrb[0].mxu0
    %v1095 = vpop.f32.mrb[0].mxu0
    %1096 = vdwg.mxu0
    %v1097 = vsel %vm258, %v1092, -inf
    %1098 = vmax.xlane.f32.xlu0 %v1097
    %v1099 = vpop.xlane.xlu0 %1098
    %v1100 = vsub.f32 %v1092, %v1099
    %v1101 = vmul.f32 %v1100, 1.442695
    %v1102 = vpow.pop %v1101
    %v1103 = vsel %vm258, %v1102, 0.0
    %1104 = vadd.xlane.f32.xlu0 %v1103
    %v1105 = vpop.xlane.xlu0 %1104
    %v1106 = vrcp.pop %v1105
    %v1107 = vmul.f32 %v1102, %v1106
    %v1108 = vpack.c.bf16 %v1107, %v1107
    %1109 = vrot.lane.b32.xlu0 %v717, 72
    %v1110 = vpop.permute.xlu0 %1109
    %v1112 = vsel %vm258, %v1108, 0
    %v1115 = vsel %vm323, %v1110, 0
    %1117 = vmatprep.subr.bf16.mxu0 0
    %1118 = vmatpush1.bf16.msra.mxu0 %v1115
    %1119 = vmatprep.subr.bf16.mxu0 0
    %1120 = vmatpush1.bf16.msra.mxu0 0
    %1121 = vmatprep.subr.bf16.mxu0 0
    %1122 = vmatpush1.bf16.msra.mxu0 0
    %1123 = vmatprep.subr.bf16.mxu0 0
    %1124 = vmatpush1.bf16.msra.mxu0 0
    %1125 = vmatprep.subr.bf16.mxu0 0
    %1126 = vmatpush1.bf16.msra.mxu0 0
    %1127 = vmatprep.subr.bf16.mxu0 0
    %1128 = vmatpush1.bf16.msra.mxu0 0
    %1129 = vmatprep.subr.bf16.mxu0 0
    %1130 = vmatpush1.bf16.msra.mxu0 0
    %1131 = vmatprep.subr.bf16.mxu0 0
    %1132 = vmatpush1.bf16.msra.mxu0 0
    %1133 = vmatprep.subr.bf16.mxu0 0
    %1134 = vmatpush1.bf16.msra.mxu0 0
    %1135 = vmatprep.subr.bf16.mxu0 0
    %1136 = vmatpush1.bf16.msra.mxu0 0
    %1137 = vmatprep.subr.bf16.mxu0 0
    %1138 = vmatpush1.bf16.msra.mxu0 0
    %1139 = vmatprep.subr.bf16.mxu0 0
    %1140 = vmatpush1.bf16.msra.mxu0 0
    %1141 = vmatprep.subr.bf16.mxu0 0
    %1142 = vmatpush1.bf16.msra.mxu0 0
    %1143 = vmatprep.subr.bf16.mxu0 0
    %1144 = vmatpush1.bf16.msra.mxu0 0
    %1145 = vmatprep.subr.bf16.mxu0 0
    %1146 = vmatpush1.bf16.msra.mxu0 0
    %1147 = vmatprep.subr.bf16.mxu0 0
    %1148 = vmatpush1.bf16.msra.mxu0 0
    %1149 = vmatprep.mubr.bf16.mxu0 0
    %1150 = vmatmul.mubr.bf16.gmra.mrb[0].mxu0 %v1112
    %v1151 = vpop.f32.mrb[0].mxu0
    %v1152 = vadd.f32 0.0, %v1151
    %v1153 = vpop.f32.mrb[0].mxu0
    %v1154 = vpop.f32.mrb[0].mxu0
    %v1155 = vpop.f32.mrb[0].mxu0
    %1156 = vdwg.mxu0
    %1158 = vrot.lane.b32.xlu0 %v932, 8
    %v1159 = vpop.permute.xlu0 %1158
    %1162 = vrot.lane.b32.xlu0 %v1042, 16
    %v1163 = vpop.permute.xlu0 %1162
    %1166 = vrot.lane.b32.xlu0 %v1152, 24
    %v1167 = vpop.permute.xlu0 %1166
    %v1169 = vsel %vm258, %v820, %v1159
    %v1170 = vsel %vm194, %v1169, %v1163
    %v1171 = vsel %vm713, %v1170, %v1167
    %v1172 = vadd.f32 %v714, %v75
    %v1173 = vadd.f32 %v1171, %v76
    %1174 = vst.msk [vmem:[#allocation10] sm:$0xff] %vm80, %v1172
    %1175 = vst.msk [vmem:[#allocation10 + $0x8] sm:$0xff] %vm80, %v1173
    // Predicated region
    $region38: #{tpu_custom_call.1} parent=1 // pred_check
      _
    $region39: #{tpu_custom_call.1} parent=1 // pred_check_branch
      %1177 = sbr.rel (0) target = $region41
    $region40: #{tpu_custom_call.1} parent=1 // pred_region
      %s1179 = ssub.s32 256, 256
      %1180 = vsyncadd [#allocation4], %s1179
      %s1181 = sshll.u32 [#allocation10], 4
      %s1182 = int_to_ptr.vmem [resolvable:$true] %s1181
      %1187 = dma.vmem_to_hbm [thread:$0]  %s1182, 256, %s5, [#allocation4], 128, 128, 8
    $region41: #{tpu_custom_call.1} parent=1 // pred_fallthru
      _
    // Predicated region
    $region42: #{tpu_custom_call.1} parent=1 // pred_check
      _
    $region43: #{tpu_custom_call.1} parent=1 // pred_check_branch
      %1189 = sbr.rel (0) target = $region45
    $region44: #{tpu_custom_call.1} parent=1 // pred_region
      %1190 = dma.done [#allocation4], 256
    $region45: #{tpu_custom_call.1} parent=1 // pred_fallthru
      _
    %1191 = vsyncpa [#allocation3], 1
    %1192 = vsyncpa [#allocation6], 1
    %1193 = vsyncpa [#allocation9], 1
    %1194 = vsyncpa [#allocation4], 1

</llo_original>
